<compile_context>
chip_gen: v7x
topology: tpu7x:2x2x1
jax: 0.10.0
libtpu: 0.0.40
codegen_flags: <defaults>
</compile_context>

<pallas_src>
import functools

import jax
import jax.numpy as jnp
from jax.experimental import pallas as pl
from jax.experimental.pallas import tpu as pltpu

NH = 512
EPS = 1e-5
NEG_SLOPE = 0.01  # nn.LeakyReLU default


def _round_up(x, m):
    return (x + m - 1) // m * m


def _bn_lrelu_layer(h, gamma, beta, mask, inv_b):
    """Training-mode BN folded to scale/shift + fused LeakyReLU, then re-zero
    padded rows.  `h` must have exactly-zero padded rows (true because conv
    biases are dropped and padded input rows are zero), so one-pass sums over
    the padded tile equal the true batch statistics."""
    s = jnp.sum(h, axis=0, keepdims=True)             # (1, C)  XLU reduce
    sq = jnp.sum(h * h, axis=0, keepdims=True)        # (1, C)
    mean = s * inv_b
    var = sq * inv_b - mean * mean                    # biased variance
    scale = gamma * jax.lax.rsqrt(var + EPS)          # EUP rsqrt (free slot)
    shift = beta - mean * scale
    h = h * scale + shift
    h = jnp.maximum(h, NEG_SLOPE * h)                 # LeakyReLU, slope in (0,1)
    return (h * mask).astype(jnp.bfloat16)            # keep pad rows exactly 0


def disc_conv_kernel(x_ref, mask_ref,
                     w1_ref, g1_ref, be1_ref,
                     w2_ref, g2_ref, be2_ref,
                     w3_ref, g3_ref, be3_ref,
                     wl_ref, bl_ref,
                     o_ref, *, inv_b):
    mask = mask_ref[...]                              # (B_pad, 1) f32

    # Conv biases are omitted: bias-before-training-BN cancels exactly.
    h = jnp.dot(x_ref[...], w1_ref[...], preferred_element_type=jnp.float32)
    h = _bn_lrelu_layer(h, g1_ref[...], be1_ref[...], mask, inv_b)

    h = jnp.dot(h, w2_ref[...], preferred_element_type=jnp.float32)
    h = _bn_lrelu_layer(h, g2_ref[...], be2_ref[...], mask, inv_b)

    h = jnp.dot(h, w3_ref[...], preferred_element_type=jnp.float32)
    h = _bn_lrelu_layer(h, g3_ref[...], be3_ref[...], mask, inv_b)

    # squeeze (H=W=1 folded away) + final Linear (lane-padded output columns).
    out = jnp.dot(h, wl_ref[...], preferred_element_type=jnp.float32) + bl_ref[...]
    o_ref[...] = out.astype(o_ref.dtype)              # lane-dense full store


def disc_conv_forward(x_nchw, params):
    """x_nchw: [B, nin, 1, 1] float32.  params: tuple from init_params."""
    (w1, b1, g1, be1, w2, b2, g2, be2, w3, b3, g3, be3, wl, bl) = params
    B, nin, H, W = x_nchw.shape
    assert H == 1 and W == 1, "DiscConv's squeeze+Linear requires 1x1 spatial"
    nout = wl.shape[-1]

    b_pad = _round_up(max(B, 8), 8)          # f32 sublane alignment
    nout_pad = _round_up(max(nout, 128), 128)  # lane-dense output store

    # Batch-pad input with zero rows; zero rows stay zero through every layer
    # (no conv bias + explicit mask), so BN stats remain exact over B rows.
    x = x_nchw.reshape(B, nin).astype(jnp.bfloat16)
    x = jnp.pad(x, ((0, b_pad - B), (0, 0)))
    mask = (jnp.arange(b_pad) < B).astype(jnp.float32)[:, None]

    bf16 = lambda a: a.astype(jnp.bfloat16)
    wl_p = jnp.pad(bf16(wl), ((0, 0), (0, nout_pad - nout)))
    bl_p = jnp.pad(bl, ((0, 0), (0, nout_pad - nout)))

    args = (x, mask,
            bf16(w1), g1, be1,
            bf16(w2), g2, be2,
            bf16(w3), g3, be3,
            wl_p, bl_p)

    vmem_spec = pl.BlockSpec(memory_space=pltpu.MemorySpace.VMEM)
    out = pl.pallas_call(
        functools.partial(disc_conv_kernel, inv_b=1.0 / B),
        out_shape=jax.ShapeDtypeStruct((b_pad, nout_pad), jnp.float32),
        in_specs=[vmem_spec] * len(args),
        out_specs=vmem_spec,
        # No grid -> single invocation, no double-buffering; buffers here are
        # ~1.5 MB total, well under the default scoped VMEM on v5e/v6e/v7x.
        compiler_params=pltpu.CompilerParams(vmem_limit_bytes=32 * 1024 * 1024),
    )(*args)
    return out[:B, :nout]


def init_params(key, nin, nout, nh=NH):
    """Deterministic synthetic parameters matching DiscConv's shapes.

    Conv weights stored already transposed as [C_in, C_out] (a 1x1 conv
    [C_out, C_in, 1, 1] on [B, C_in, 1, 1] is exactly x @ W.T)."""
    ks = jax.random.split(key, 8)

    def w(k, fan_in, fan_out):
        return (jax.random.normal(k, (fan_in, fan_out), jnp.float32)
                / jnp.sqrt(jnp.float32(fan_in)))

    w1 = w(ks[0], nin, nh); b1 = 0.01 * jax.random.normal(ks[1], (1, nh), jnp.float32)
    w2 = w(ks[2], nh, nh);  b2 = 0.01 * jax.random.normal(ks[3], (1, nh), jnp.float32)
    w3 = w(ks[4], nh, nh);  b3 = 0.01 * jax.random.normal(ks[5], (1, nh), jnp.float32)
    wl = w(ks[6], nh, nout); bl = 0.01 * jax.random.normal(ks[7], (1, nout), jnp.float32)
    # BN affine params (gamma=1, beta=0, as nn.BatchNorm2d initializes them).
    g = jnp.ones((1, nh), jnp.float32)
    be = jnp.zeros((1, nh), jnp.float32)
    return (w1, b1, g, be,
            w2, b2, g, be,
            w3, b3, g, be,
            wl, bl)


def disc_conv_reference(x_nchw, params):
    """Pure-JAX reference.  It keeps the conv biases (they cancel exactly under
    training-mode BN) and mirrors the kernel's bf16 matmul operands / f32
    accumulation so the comparison isolates kernel bugs, not dtype policy."""
    (w1, b1, g1, be1, w2, b2, g2, be2, w3, b3, g3, be3, wl, bl) = params
    B = x_nchw.shape[0]
    h = x_nchw.reshape(B, -1)

    def mm(a, w_):
        return jnp.dot(a.astype(jnp.bfloat16), w_.astype(jnp.bfloat16),
                       preferred_element_type=jnp.float32)

    for w_, b_, g_, be_ in ((w1, b1, g1, be1), (w2, b2, g2, be2), (w3, b3, g3, be3)):
        h = mm(h, w_) + b_
        m = jnp.mean(h, axis=0, keepdims=True)
        v = jnp.mean(jnp.square(h - m), axis=0, keepdims=True)   # biased var
        h = (h - m) * jax.lax.rsqrt(v + EPS) * g_ + be_
        h = jnp.where(h >= 0, h, NEG_SLOPE * h)
    return mm(h, wl) + bl


if __name__ == "__main__":
    B, NIN, NOUT = 2, 4, 10
    key = jax.random.PRNGKey(0)
    kx, kp = jax.random.split(key)

    x = jax.random.normal(kx, (B, NIN, 1, 1), jnp.float32)   # NCHW, spatial 1x1
    params = init_params(kp, NIN, NOUT)

    out = jax.block_until_ready(disc_conv_forward(x, params))
    ref = jax.block_until_ready(disc_conv_reference(x, params))

    assert out.shape == (B, NOUT), out.shape
    # Loose-ish tolerance: bf16 matmul operands + B=2 training-mode BatchNorm
    # (tiny per-channel variances) can amplify rounding-order differences.
    assert jnp.allclose(out, ref, atol=5e-2, rtol=5e-2), (
        float(jnp.max(jnp.abs(out - ref))))
    print("KERNEL_OK")
</pallas_src>

<mosaic_0001>
module attributes {stable_mosaic.version = 11 : i64} {
  func.func @disc_conv_kernel(%arg0: memref<8x4xbf16, #tpu.memory_space<vmem>>, %arg1: memref<8x1xf32, #tpu.memory_space<vmem>>, %arg2: memref<4x512xbf16, #tpu.memory_space<vmem>>, %arg3: memref<1x512xf32, #tpu.memory_space<vmem>>, %arg4: memref<1x512xf32, #tpu.memory_space<vmem>>, %arg5: memref<512x512xbf16, #tpu.memory_space<vmem>>, %arg6: memref<1x512xf32, #tpu.memory_space<vmem>>, %arg7: memref<1x512xf32, #tpu.memory_space<vmem>>, %arg8: memref<512x512xbf16, #tpu.memory_space<vmem>>, %arg9: memref<1x512xf32, #tpu.memory_space<vmem>>, %arg10: memref<1x512xf32, #tpu.memory_space<vmem>>, %arg11: memref<512x128xbf16, #tpu.memory_space<vmem>>, %arg12: memref<1x128xf32, #tpu.memory_space<vmem>>, %arg13: memref<8x128xf32, #tpu.memory_space<vmem>>) attributes {dimension_semantics = [], scalar_prefetch = 0 : i64, scratch_operands = 0 : i64, tpu.core_type = #tpu.core_type<tc>} {
    %c0 = arith.constant 0 : index
    %c0_0 = arith.constant 0 : index
    %0 = vector.load %arg1[%c0, %c0_0] : memref<8x1xf32, #tpu.memory_space<vmem>>, vector<8x1xf32>
    %c0_1 = arith.constant 0 : index
    %c0_2 = arith.constant 0 : index
    %1 = vector.load %arg0[%c0_1, %c0_2] : memref<8x4xbf16, #tpu.memory_space<vmem>>, vector<8x4xbf16>
    %c0_3 = arith.constant 0 : index
    %c0_4 = arith.constant 0 : index
    %2 = vector.load %arg2[%c0_3, %c0_4] : memref<4x512xbf16, #tpu.memory_space<vmem>>, vector<4x512xbf16>
    %cst = arith.constant dense<0.000000e+00> : vector<8x512xf32>
    %3 = tpu.matmul %1, %2, %cst {dimension_numbers = #tpu.dot_dimension_numbers<[1], [0], [0], [1], [0, 0, 1, 1], [], []>} : vector<8x4xbf16>, vector<4x512xbf16>, vector<8x512xf32> -> vector<8x512xf32>
    %c0_5 = arith.constant 0 : index
    %c0_6 = arith.constant 0 : index
    %4 = vector.load %arg3[%c0_5, %c0_6] : memref<1x512xf32, #tpu.memory_space<vmem>>, vector<1x512xf32>
    %c0_7 = arith.constant 0 : index
    %c0_8 = arith.constant 0 : index
    %5 = vector.load %arg4[%c0_7, %c0_8] : memref<1x512xf32, #tpu.memory_space<vmem>>, vector<1x512xf32>
    %cst_9 = arith.constant dense<0.000000e+00> : vector<512xf32>
    %6 = vector.multi_reduction <add>, %3, %cst_9 [0] : vector<8x512xf32> to vector<512xf32>
    %7 = vector.shape_cast %6 : vector<512xf32> to vector<1x512xf32>
    %8 = arith.mulf %3, %3 : vector<8x512xf32>
    %cst_10 = arith.constant dense<0.000000e+00> : vector<512xf32>
    %9 = vector.multi_reduction <add>, %8, %cst_10 [0] : vector<8x512xf32> to vector<512xf32>
    %10 = vector.shape_cast %9 : vector<512xf32> to vector<1x512xf32>
    %cst_11 = arith.constant 5.000000e-01 : f32
    %11 = vector.broadcast %cst_11 : f32 to vector<1x512xf32>
    %12 = arith.mulf %7, %11 : vector<1x512xf32>
    %cst_12 = arith.constant 5.000000e-01 : f32
    %13 = vector.broadcast %cst_12 : f32 to vector<1x512xf32>
    %14 = arith.mulf %10, %13 : vector<1x512xf32>
    %15 = arith.mulf %12, %12 : vector<1x512xf32>
    %16 = arith.subf %14, %15 : vector<1x512xf32>
    %cst_13 = arith.constant 9.99999974E-6 : f32
    %17 = vector.broadcast %cst_13 : f32 to vector<1x512xf32>
    %18 = arith.addf %16, %17 : vector<1x512xf32>
    %19 = math.rsqrt %18 : vector<1x512xf32>
    %20 = arith.mulf %4, %19 : vector<1x512xf32>
    %21 = arith.mulf %12, %20 : vector<1x512xf32>
    %22 = arith.subf %5, %21 : vector<1x512xf32>
    %23 = vector.broadcast %20 : vector<1x512xf32> to vector<8x512xf32>
    %24 = arith.mulf %3, %23 : vector<8x512xf32>
    %25 = vector.broadcast %22 : vector<1x512xf32> to vector<8x512xf32>
    %26 = arith.addf %24, %25 : vector<8x512xf32>
    %cst_14 = arith.constant 0.00999999977 : f32
    %27 = vector.broadcast %cst_14 : f32 to vector<8x512xf32>
    %28 = arith.mulf %27, %26 : vector<8x512xf32>
    %29 = arith.maximumf %26, %28 : vector<8x512xf32>
    %30 = vector.broadcast %0 : vector<8x1xf32> to vector<8x512xf32>
    %31 = arith.mulf %29, %30 : vector<8x512xf32>
    %32 = arith.truncf %31 : vector<8x512xf32> to vector<8x512xbf16>
    %c0_15 = arith.constant 0 : index
    %c0_16 = arith.constant 0 : index
    %33 = vector.load %arg5[%c0_15, %c0_16] : memref<512x512xbf16, #tpu.memory_space<vmem>>, vector<512x512xbf16>
    %cst_17 = arith.constant dense<0.000000e+00> : vector<8x512xf32>
    %34 = tpu.matmul %32, %33, %cst_17 {dimension_numbers = #tpu.dot_dimension_numbers<[1], [0], [0], [1], [0, 0, 1, 1], [], []>} : vector<8x512xbf16>, vector<512x512xbf16>, vector<8x512xf32> -> vector<8x512xf32>
    %c0_18 = arith.constant 0 : index
    %c0_19 = arith.constant 0 : index
    %35 = vector.load %arg6[%c0_18, %c0_19] : memref<1x512xf32, #tpu.memory_space<vmem>>, vector<1x512xf32>
    %c0_20 = arith.constant 0 : index
    %c0_21 = arith.constant 0 : index
    %36 = vector.load %arg7[%c0_20, %c0_21] : memref<1x512xf32, #tpu.memory_space<vmem>>, vector<1x512xf32>
    %cst_22 = arith.constant dense<0.000000e+00> : vector<512xf32>
    %37 = vector.multi_reduction <add>, %34, %cst_22 [0] : vector<8x512xf32> to vector<512xf32>
    %38 = vector.shape_cast %37 : vector<512xf32> to vector<1x512xf32>
    %39 = arith.mulf %34, %34 : vector<8x512xf32>
    %cst_23 = arith.constant dense<0.000000e+00> : vector<512xf32>
    %40 = vector.multi_reduction <add>, %39, %cst_23 [0] : vector<8x512xf32> to vector<512xf32>
    %41 = vector.shape_cast %40 : vector<512xf32> to vector<1x512xf32>
    %cst_24 = arith.constant 5.000000e-01 : f32
    %42 = vector.broadcast %cst_24 : f32 to vector<1x512xf32>
    %43 = arith.mulf %38, %42 : vector<1x512xf32>
    %cst_25 = arith.constant 5.000000e-01 : f32
    %44 = vector.broadcast %cst_25 : f32 to vector<1x512xf32>
    %45 = arith.mulf %41, %44 : vector<1x512xf32>
    %46 = arith.mulf %43, %43 : vector<1x512xf32>
    %47 = arith.subf %45, %46 : vector<1x512xf32>
    %cst_26 = arith.constant 9.99999974E-6 : f32
    %48 = vector.broadcast %cst_26 : f32 to vector<1x512xf32>
    %49 = arith.addf %47, %48 : vector<1x512xf32>
    %50 = math.rsqrt %49 : vector<1x512xf32>
    %51 = arith.mulf %35, %50 : vector<1x512xf32>
    %52 = arith.mulf %43, %51 : vector<1x512xf32>
    %53 = arith.subf %36, %52 : vector<1x512xf32>
    %54 = vector.broadcast %51 : vector<1x512xf32> to vector<8x512xf32>
    %55 = arith.mulf %34, %54 : vector<8x512xf32>
    %56 = vector.broadcast %53 : vector<1x512xf32> to vector<8x512xf32>
    %57 = arith.addf %55, %56 : vector<8x512xf32>
    %cst_27 = arith.constant 0.00999999977 : f32
    %58 = vector.broadcast %cst_27 : f32 to vector<8x512xf32>
    %59 = arith.mulf %58, %57 : vector<8x512xf32>
    %60 = arith.maximumf %57, %59 : vector<8x512xf32>
    %61 = vector.broadcast %0 : vector<8x1xf32> to vector<8x512xf32>
    %62 = arith.mulf %60, %61 : vector<8x512xf32>
    %63 = arith.truncf %62 : vector<8x512xf32> to vector<8x512xbf16>
    %c0_28 = arith.constant 0 : index
    %c0_29 = arith.constant 0 : index
    %64 = vector.load %arg8[%c0_28, %c0_29] : memref<512x512xbf16, #tpu.memory_space<vmem>>, vector<512x512xbf16>
    %cst_30 = arith.constant dense<0.000000e+00> : vector<8x512xf32>
    %65 = tpu.matmul %63, %64, %cst_30 {dimension_numbers = #tpu.dot_dimension_numbers<[1], [0], [0], [1], [0, 0, 1, 1], [], []>} : vector<8x512xbf16>, vector<512x512xbf16>, vector<8x512xf32> -> vector<8x512xf32>
    %c0_31 = arith.constant 0 : index
    %c0_32 = arith.constant 0 : index
    %66 = vector.load %arg9[%c0_31, %c0_32] : memref<1x512xf32, #tpu.memory_space<vmem>>, vector<1x512xf32>
    %c0_33 = arith.constant 0 : index
    %c0_34 = arith.constant 0 : index
    %67 = vector.load %arg10[%c0_33, %c0_34] : memref<1x512xf32, #tpu.memory_space<vmem>>, vector<1x512xf32>
    %cst_35 = arith.constant dense<0.000000e+00> : vector<512xf32>
    %68 = vector.multi_reduction <add>, %65, %cst_35 [0] : vector<8x512xf32> to vector<512xf32>
    %69 = vector.shape_cast %68 : vector<512xf32> to vector<1x512xf32>
    %70 = arith.mulf %65, %65 : vector<8x512xf32>
    %cst_36 = arith.constant dense<0.000000e+00> : vector<512xf32>
    %71 = vector.multi_reduction <add>, %70, %cst_36 [0] : vector<8x512xf32> to vector<512xf32>
    %72 = vector.shape_cast %71 : vector<512xf32> to vector<1x512xf32>
    %cst_37 = arith.constant 5.000000e-01 : f32
    %73 = vector.broadcast %cst_37 : f32 to vector<1x512xf32>
    %74 = arith.mulf %69, %73 : vector<1x512xf32>
    %cst_38 = arith.constant 5.000000e-01 : f32
    %75 = vector.broadcast %cst_38 : f32 to vector<1x512xf32>
    %76 = arith.mulf %72, %75 : vector<1x512xf32>
    %77 = arith.mulf %74, %74 : vector<1x512xf32>
    %78 = arith.subf %76, %77 : vector<1x512xf32>
    %cst_39 = arith.constant 9.99999974E-6 : f32
    %79 = vector.broadcast %cst_39 : f32 to vector<1x512xf32>
    %80 = arith.addf %78, %79 : vector<1x512xf32>
    %81 = math.rsqrt %80 : vector<1x512xf32>
    %82 = arith.mulf %66, %81 : vector<1x512xf32>
    %83 = arith.mulf %74, %82 : vector<1x512xf32>
    %84 = arith.subf %67, %83 : vector<1x512xf32>
    %85 = vector.broadcast %82 : vector<1x512xf32> to vector<8x512xf32>
    %86 = arith.mulf %65, %85 : vector<8x512xf32>
    %87 = vector.broadcast %84 : vector<1x512xf32> to vector<8x512xf32>
    %88 = arith.addf %86, %87 : vector<8x512xf32>
    %cst_40 = arith.constant 0.00999999977 : f32
    %89 = vector.broadcast %cst_40 : f32 to vector<8x512xf32>
    %90 = arith.mulf %89, %88 : vector<8x512xf32>
    %91 = arith.maximumf %88, %90 : vector<8x512xf32>
    %92 = vector.broadcast %0 : vector<8x1xf32> to vector<8x512xf32>
    %93 = arith.mulf %91, %92 : vector<8x512xf32>
    %94 = arith.truncf %93 : vector<8x512xf32> to vector<8x512xbf16>
    %c0_41 = arith.constant 0 : index
    %c0_42 = arith.constant 0 : index
    %95 = vector.load %arg11[%c0_41, %c0_42] : memref<512x128xbf16, #tpu.memory_space<vmem>>, vector<512x128xbf16>
    %cst_43 = arith.constant dense<0.000000e+00> : vector<8x128xf32>
    %96 = tpu.matmul %94, %95, %cst_43 {dimension_numbers = #tpu.dot_dimension_numbers<[1], [0], [0], [1], [0, 0, 1, 1], [], []>} : vector<8x512xbf16>, vector<512x128xbf16>, vector<8x128xf32> -> vector<8x128xf32>
    %c0_44 = arith.constant 0 : index
    %c0_45 = arith.constant 0 : index
    %97 = vector.load %arg12[%c0_44, %c0_45] : memref<1x128xf32, #tpu.memory_space<vmem>>, vector<1x128xf32>
    %98 = vector.broadcast %97 : vector<1x128xf32> to vector<8x128xf32>
    %99 = arith.addf %96, %98 : vector<8x128xf32>
    %c0_46 = arith.constant 0 : index
    %c0_47 = arith.constant 0 : index
    %100 = vector.load %arg13[%c0_46, %c0_47] : memref<8x128xf32, #tpu.memory_space<vmem>>, vector<8x128xf32>
    tpu.vector_store %arg13[%c0_46, %c0_47], %99 {strides = array<i32>} : memref<8x128xf32, #tpu.memory_space<vmem>>, vector<8x128xf32>,
    return
  }
}

</mosaic_0001>

<llo_original>
// kernel: tpu_custom_call.1
$region0: #{tpu_custom_call.1}
  #allocation0 [shape = 'u32[]', space=smem, size = 0x4, offset = 0x4, fixed_abs, tag = 'smem constant byte address 0x4 - core index']
  #allocation1 [shape = 'u32[144,128]{1,0:T(1,128)}', space=vmem, size = 0x12000, scoped, tag = 'internal scratch']
  %s0 = inlined_call_operand.vmem [shape: bf16[8,4], index: 0, kind: input, shape index: {}]
  %s1 = inlined_call_operand.vmem [shape: f32[8,1], index: 1, kind: input, shape index: {}]
  %s2 = inlined_call_operand.vmem [shape: bf16[4,512], index: 2, kind: input, shape index: {}]
  %s3 = inlined_call_operand.vmem [shape: f32[1,512], index: 3, kind: input, shape index: {}]
  %s4 = inlined_call_operand.vmem [shape: f32[1,512], index: 4, kind: input, shape index: {}]
  %s5 = inlined_call_operand.hbm [shape: bf16[512,512], index: 5, kind: input, shape index: {}]
  %s6 = inlined_call_operand.vmem [shape: f32[1,512], index: 6, kind: input, shape index: {}]
  %s7 = inlined_call_operand.vmem [shape: f32[1,512], index: 7, kind: input, shape index: {}]
  %s8 = inlined_call_operand.hbm [shape: bf16[512,512], index: 8, kind: input, shape index: {}]
  %s9 = inlined_call_operand.vmem [shape: f32[1,512], index: 9, kind: input, shape index: {}]
  %s10 = inlined_call_operand.vmem [shape: f32[1,512], index: 10, kind: input, shape index: {}]
  %s11 = inlined_call_operand.hbm [shape: bf16[512,128], index: 11, kind: input, shape index: {}]
  %s12 = inlined_call_operand.vmem [shape: f32[1,128], index: 12, kind: input, shape index: {}]
  %s13 = inlined_call_operand.hbm [shape: f32[8,128], index: 13, kind: output, shape index: {}]
  %s14 = sld [smem:[#allocation0]]
  $region74: #{tpu_custom_call.1} parent=0
    _
  %s16 = ssub.s32 1, %s14
  %s17 = scalar_select 0, %s16, %s14
  $region1: #{tpu_custom_call.1} parent=0
    #allocation2 [shape = 'u8[524288]{0}', space=vmem, size = 0x80000, scoped, tag = 'input window, operand 5, single buffered']
    #allocation3 [shape = 's32[1]{0}', space=sflag, size = 0x4, scoped, tag = 'scoped memory for tpu_custom_call.1']
    #allocation4 [shape = 's32[1]{0}', space=sflag, size = 0x4, scoped, tag = 'scoped memory for tpu_custom_call.1']
    #allocation5 [shape = 'u8[524288]{0}', space=vmem, size = 0x80000, scoped, tag = 'input window, operand 8, single buffered']
    #allocation6 [shape = 's32[1]{0}', space=sflag, size = 0x4, scoped, tag = 'scoped memory for tpu_custom_call.1']
    #allocation7 [shape = 'u8[131072]{0}', space=vmem, size = 0x20000, scoped, tag = 'input window, operand 11, single buffered']
    #allocation8 [shape = 'u8[4096]{0}', space=vmem, size = 0x1000, scoped, tag = 'output window, operand 0, single buffered']
    %18 = vsyncpa [#allocation3], 0
    %19 = vsyncpa [#allocation6], 0
    %20 = vsyncpa [#allocation4], 0
    // Predicated region
    $region2: #{tpu_custom_call.1} parent=1 // pred_check
      _
    $region3: #{tpu_custom_call.1} parent=1 // pred_check_branch
      %22 = sbr.rel (0) target = $region5
    $region4: #{tpu_custom_call.1} parent=1 // pred_region
      _
    $region5: #{tpu_custom_call.1} parent=1 // pred_fallthru
      _
    // Predicated region
    $region6: #{tpu_custom_call.1} parent=1 // pred_check
      _
    $region7: #{tpu_custom_call.1} parent=1 // pred_check_branch
      %24 = sbr.rel (0) target = $region9
    $region8: #{tpu_custom_call.1} parent=1 // pred_region
      _
    $region9: #{tpu_custom_call.1} parent=1 // pred_fallthru
      _
    // Predicated region
    $region10: #{tpu_custom_call.1} parent=1 // pred_check
      _
    $region11: #{tpu_custom_call.1} parent=1 // pred_check_branch
      %26 = sbr.rel (0) target = $region13
    $region12: #{tpu_custom_call.1} parent=1 // pred_region
      _
    $region13: #{tpu_custom_call.1} parent=1 // pred_fallthru
      _
    // Predicated region
    $region14: #{tpu_custom_call.1} parent=1 // pred_check
      _
    $region15: #{tpu_custom_call.1} parent=1 // pred_check_branch
      %28 = sbr.rel (0) target = $region17
    $region16: #{tpu_custom_call.1} parent=1 // pred_region
      _
    $region17: #{tpu_custom_call.1} parent=1 // pred_fallthru
      _
    // Predicated region
    $region18: #{tpu_custom_call.1} parent=1 // pred_check
      _
    $region19: #{tpu_custom_call.1} parent=1 // pred_check_branch
      %30 = sbr.rel (0) target = $region21
    $region20: #{tpu_custom_call.1} parent=1 // pred_region
      _
    $region21: #{tpu_custom_call.1} parent=1 // pred_fallthru
      _
    // Predicated region
    $region22: #{tpu_custom_call.1} parent=1 // pred_check
      _
    $region23: #{tpu_custom_call.1} parent=1 // pred_check_branch
      %32 = sbr.rel (0) target = $region25
    $region24: #{tpu_custom_call.1} parent=1 // pred_region
      %s34 = ssub.s32 16384, 16384
      %35 = vsyncadd [#allocation3], %s34
      %s36 = sshll.u32 [#allocation2], 4
      %s37 = int_to_ptr.vmem [resolvable:$true] %s36
      %42 = dma.hbm_to_vmem [thread:$0]  %s5, 16384, %s37, [#allocation3], 256, 256, 16
    $region25: #{tpu_custom_call.1} parent=1 // pred_fallthru
      _
    // Predicated region
    $region26: #{tpu_custom_call.1} parent=1 // pred_check
      _
    $region27: #{tpu_custom_call.1} parent=1 // pred_check_branch
      %44 = sbr.rel (0) target = $region29
    $region28: #{tpu_custom_call.1} parent=1 // pred_region
      _
    $region29: #{tpu_custom_call.1} parent=1 // pred_fallthru
      _
    // Predicated region
    $region30: #{tpu_custom_call.1} parent=1 // pred_check
      _
    $region31: #{tpu_custom_call.1} parent=1 // pred_check_branch
      %46 = sbr.rel (0) target = $region33
    $region32: #{tpu_custom_call.1} parent=1 // pred_region
      _
    $region33: #{tpu_custom_call.1} parent=1 // pred_fallthru
      _
    // Predicated region
    $region34: #{tpu_custom_call.1} parent=1 // pred_check
      _
    $region35: #{tpu_custom_call.1} parent=1 // pred_check_branch
      %48 = sbr.rel (0) target = $region37
    $region36: #{tpu_custom_call.1} parent=1 // pred_region
      %s50 = ssub.s32 16384, 16384
      %51 = vsyncadd [#allocation6], %s50
      %s52 = sshll.u32 [#allocation5], 4
      %s53 = int_to_ptr.vmem [resolvable:$true] %s52
      %58 = dma.hbm_to_vmem [thread:$0]  %s8, 16384, %s53, [#allocation6], 256, 256, 16
    $region37: #{tpu_custom_call.1} parent=1 // pred_fallthru
      _
    // Predicated region
    $region38: #{tpu_custom_call.1} parent=1 // pred_check
      _
    $region39: #{tpu_custom_call.1} parent=1 // pred_check_branch
      %60 = sbr.rel (0) target = $region41
    $region40: #{tpu_custom_call.1} parent=1 // pred_region
      _
    $region41: #{tpu_custom_call.1} parent=1 // pred_fallthru
      _
    // Predicated region
    $region42: #{tpu_custom_call.1} parent=1 // pred_check
      _
    $region43: #{tpu_custom_call.1} parent=1 // pred_check_branch
      %62 = sbr.rel (0) target = $region45
    $region44: #{tpu_custom_call.1} parent=1 // pred_region
      _
    $region45: #{tpu_custom_call.1} parent=1 // pred_fallthru
      _
    // Predicated region
    $region46: #{tpu_custom_call.1} parent=1 // pred_check
      _
    $region47: #{tpu_custom_call.1} parent=1 // pred_check_branch
      %64 = sbr.rel (0) target = $region49
    $region48: #{tpu_custom_call.1} parent=1 // pred_region
      %s66 = ssub.s32 4096, 4096
      %67 = vsyncadd [#allocation6], %s66
      %s68 = sshll.u32 [#allocation7], 4
      %s69 = int_to_ptr.vmem [resolvable:$true] %s68
      %74 = dma.hbm_to_vmem [thread:$0]  %s11, 4096, %s69, [#allocation6], 64, 64, 4
    $region49: #{tpu_custom_call.1} parent=1 // pred_fallthru
      _
    // Predicated region
    $region50: #{tpu_custom_call.1} parent=1 // pred_check
      _
    $region51: #{tpu_custom_call.1} parent=1 // pred_check_branch
      %76 = sbr.rel (0) target = $region53
    $region52: #{tpu_custom_call.1} parent=1 // pred_region
      _
    $region53: #{tpu_custom_call.1} parent=1 // pred_fallthru
      _
    // Predicated region
    $region54: #{tpu_custom_call.1} parent=1 // pred_check
      _
    $region55: #{tpu_custom_call.1} parent=1 // pred_check_branch
      %78 = sbr.rel (0) target = $region57
    $region56: #{tpu_custom_call.1} parent=1 // pred_region
      %79 = dma.done [#allocation3], 16384
    $region57: #{tpu_custom_call.1} parent=1 // pred_fallthru
      _
    // Predicated region
    $region58: #{tpu_custom_call.1} parent=1 // pred_check
      _
    $region59: #{tpu_custom_call.1} parent=1 // pred_check_branch
      %81 = sbr.rel (0) target = $region61
    $region60: #{tpu_custom_call.1} parent=1 // pred_region
      %82 = dma.done [#allocation6], 16384
    $region61: #{tpu_custom_call.1} parent=1 // pred_fallthru
      _
    // Predicated region
    $region62: #{tpu_custom_call.1} parent=1 // pred_check
      _
    $region63: #{tpu_custom_call.1} parent=1 // pred_check_branch
      %84 = sbr.rel (0) target = $region65
    $region64: #{tpu_custom_call.1} parent=1 // pred_region
      %85 = dma.done [#allocation6], 4096
    $region65: #{tpu_custom_call.1} parent=1 // pred_fallthru
      _
    %v87 = vld [vmem:[%s1] sm:$0xff]
    %v88 = vld [vmem:[%s0] sm:$0xf]
    %v89 = vld [vmem:[%s2] sm:$0xff]
    %v91 = vcombine.high %v89, %v89
    %v93 = vunpack.c.l.s4 1983009808
    %v94 = vunpack.c.0.s8 %v93
    %v95 = vlaneseq
    %v96 = vshrl.u32 %v95, 7
    %v97 = vsub.s32 %v94, %v96
    %v98 = vrot.slane %v89, %v97
    %v100 = vunpack.c.l.s4 1983009808
    %v101 = vunpack.c.0.s8 %v100
    %v102 = vlaneseq
    %v103 = vshrl.u32 %v102, 7
    %v104 = vsub.s32 %v101, %v103
    %v105 = vrot.slane %v91, %v104
    %v106 = vcombine.high %v98, %v98
    %v107 = vcombine.high %v105, %v105
    %vm108 = vcmask 31744
    %v110 = vsel %vm108, %v88, 0
    %vm112 = vcmask 1041408
    %v114 = vsel %vm112, %v98, 0
    %v117 = vsel %vm112, %v106, 0
    %v120 = vsel %vm112, %v105, 0
    %v123 = vsel %vm112, %v107, 0
    %125 = vmatprep.subr.bf16.mxu0 %v117
    %126 = vmatpush1.bf16.msra.mxu0 %v114
    %127 = vmatprep.subr.bf16.mxu0 0
    %128 = vmatpush1.bf16.msra.mxu0 0
    %129 = vmatprep.subr.bf16.mxu0 0
    %130 = vmatpush1.bf16.msra.mxu0 0
    %131 = vmatprep.subr.bf16.mxu0 0
    %132 = vmatpush1.bf16.msra.mxu0 0
    %133 = vmatprep.subr.bf16.mxu0 0
    %134 = vmatpush1.bf16.msra.mxu0 0
    %135 = vmatprep.subr.bf16.mxu0 0
    %136 = vmatpush1.bf16.msra.mxu0 0
    %137 = vmatprep.subr.bf16.mxu0 0
    %138 = vmatpush1.bf16.msra.mxu0 0
    %139 = vmatprep.subr.bf16.mxu0 0
    %140 = vmatpush1.bf16.msra.mxu0 0
    %141 = vmatprep.subr.bf16.mxu0 0
    %142 = vmatpush1.bf16.msra.mxu0 0
    %143 = vmatprep.subr.bf16.mxu0 0
    %144 = vmatpush1.bf16.msra.mxu0 0
    %145 = vmatprep.subr.bf16.mxu0 0
    %146 = vmatpush1.bf16.msra.mxu0 0
    %147 = vmatprep.subr.bf16.mxu0 0
    %148 = vmatpush1.bf16.msra.mxu0 0
    %149 = vmatprep.subr.bf16.mxu0 0
    %150 = vmatpush1.bf16.msra.mxu0 0
    %151 = vmatprep.subr.bf16.mxu0 0
    %152 = vmatpush1.bf16.msra.mxu0 0
    %153 = vmatprep.subr.bf16.mxu0 0
    %154 = vmatpush1.bf16.msra.mxu0 0
    %155 = vmatprep.subr.bf16.mxu0 0
    %156 = vmatpush1.bf16.msra.mxu0 0
    %157 = vmatprep.mubr.bf16.mxu0 0
    %158 = vmatmul.mubr.bf16.gmra.mrb[0].mxu0 %v110
    %v159 = vpop.f32.mrb[0].mxu0
    %v160 = vadd.f32 0.0, %v159
    %v161 = vpop.f32.mrb[0].mxu0
    %v162 = vadd.f32 0.0, %v161
    %v163 = vpop.f32.mrb[0].mxu0
    %v164 = vpop.f32.mrb[0].mxu0
    %165 = vdwg.mxu0
    %166 = vmatprep.subr.bf16.mxu0 %v123
    %167 = vmatpush1.bf16.msra.mxu0 %v120
    %168 = vmatprep.subr.bf16.mxu0 0
    %169 = vmatpush1.bf16.msra.mxu0 0
    %170 = vmatprep.subr.bf16.mxu0 0
    %171 = vmatpush1.bf16.msra.mxu0 0
    %172 = vmatprep.subr.bf16.mxu0 0
    %173 = vmatpush1.bf16.msra.mxu0 0
    %174 = vmatprep.subr.bf16.mxu0 0
    %175 = vmatpush1.bf16.msra.mxu0 0
    %176 = vmatprep.subr.bf16.mxu0 0
    %177 = vmatpush1.bf16.msra.mxu0 0
    %178 = vmatprep.subr.bf16.mxu0 0
    %179 = vmatpush1.bf16.msra.mxu0 0
    %180 = vmatprep.subr.bf16.mxu0 0
    %181 = vmatpush1.bf16.msra.mxu0 0
    %182 = vmatprep.subr.bf16.mxu0 0
    %183 = vmatpush1.bf16.msra.mxu0 0
    %184 = vmatprep.subr.bf16.mxu0 0
    %185 = vmatpush1.bf16.msra.mxu0 0
    %186 = vmatprep.subr.bf16.mxu0 0
    %187 = vmatpush1.bf16.msra.mxu0 0
    %188 = vmatprep.subr.bf16.mxu0 0
    %189 = vmatpush1.bf16.msra.mxu0 0
    %190 = vmatprep.subr.bf16.mxu0 0
    %191 = vmatpush1.bf16.msra.mxu0 0
    %192 = vmatprep.subr.bf16.mxu0 0
    %193 = vmatpush1.bf16.msra.mxu0 0
    %194 = vmatprep.subr.bf16.mxu0 0
    %195 = vmatpush1.bf16.msra.mxu0 0
    %196 = vmatprep.subr.bf16.mxu0 0
    %197 = vmatpush1.bf16.msra.mxu0 0
    %198 = vmatprep.mubr.bf16.mxu0 0
    %199 = vmatmul.mubr.bf16.gmra.mrb[0].mxu0 %v110
    %v200 = vpop.f32.mrb[0].mxu0
    %v201 = vadd.f32 0.0, %v200
    %v202 = vpop.f32.mrb[0].mxu0
    %v203 = vadd.f32 0.0, %v202
    %v204 = vpop.f32.mrb[0].mxu0
    %v205 = vpop.f32.mrb[0].mxu0
    %206 = vdwg.mxu0
    %v207 = vld [vmem:[%s3] sm:$0xf]
    %v208 = vld [vmem:[%s4] sm:$0xf]
    %v209 = vrot.slane %v160, 4
    %v210 = vadd.f32 %v160, %v209
    %v211 = vrot.slane %v210, 2
    %v212 = vadd.f32 %v210, %v211
    %v213 = vrot.slane %v212, 1
    %v214 = vadd.f32 %v212, %v213
    %v215 = vrot.slane %v162, 4
    %v216 = vadd.f32 %v162, %v215
    %v217 = vrot.slane %v216, 2
    %v218 = vadd.f32 %v216, %v217
    %v219 = vrot.slane %v218, 1
    %v220 = vadd.f32 %v218, %v219
    %v221 = vrot.slane %v201, 4
    %v222 = vadd.f32 %v201, %v221
    %v223 = vrot.slane %v222, 2
    %v224 = vadd.f32 %v222, %v223
    %v225 = vrot.slane %v224, 1
    %v226 = vadd.f32 %v224, %v225
    %v227 = vrot.slane %v203, 4
    %v228 = vadd.f32 %v203, %v227
    %v229 = vrot.slane %v228, 2
    %v230 = vadd.f32 %v228, %v229
    %v231 = vrot.slane %v230, 1
    %v232 = vadd.f32 %v230, %v231
    %v233 = vmul.f32 %v160, %v160
    %v234 = vmul.f32 %v162, %v162
    %v235 = vmul.f32 %v201, %v201
    %v236 = vmul.f32 %v203, %v203
    %v237 = vrot.slane %v233, 4
    %v238 = vadd.f32 %v233, %v237
    %v239 = vrot.slane %v238, 2
    %v240 = vadd.f32 %v238, %v239
    %v241 = vrot.slane %v240, 1
    %v242 = vadd.f32 %v240, %v241
    %v243 = vrot.slane %v234, 4
    %v244 = vadd.f32 %v234, %v243
    %v245 = vrot.slane %v244, 2
    %v246 = vadd.f32 %v244, %v245
    %v247 = vrot.slane %v246, 1
    %v248 = vadd.f32 %v246, %v247
    %v249 = vrot.slane %v235, 4
    %v250 = vadd.f32 %v235, %v249
    %v251 = vrot.slane %v250, 2
    %v252 = vadd.f32 %v250, %v251
    %v253 = vrot.slane %v252, 1
    %v254 = vadd.f32 %v252, %v253
    %v255 = vrot.slane %v236, 4
    %v256 = vadd.f32 %v236, %v255
    %v257 = vrot.slane %v256, 2
    %v258 = vadd.f32 %v256, %v257
    %v259 = vrot.slane %v258, 1
    %v260 = vadd.f32 %v258, %v259
    %v261 = vmul.f32 %v214, 0.5
    %v262 = vmul.f32 %v220, 0.5
    %v263 = vmul.f32 %v226, 0.5
    %v264 = vmul.f32 %v232, 0.5
    %v265 = vmul.f32 %v242, 0.5
    %v266 = vmul.f32 %v248, 0.5
    %v267 = vmul.f32 %v254, 0.5
    %v268 = vmul.f32 %v260, 0.5
    %v269 = vmul.f32 %v261, %v261
    %v270 = vmul.f32 %v262, %v262
    %v271 = vmul.f32 %v263, %v263
    %v272 = vmul.f32 %v264, %v264
    %v273 = vsub.f32 %v265, %v269
    %v274 = vsub.f32 %v266, %v270
    %v275 = vsub.f32 %v267, %v271
    %v276 = vsub.f32 %v268, %v272
    %v277 = vadd.f32 %v273, 1e-05
    %v278 = vadd.f32 %v274, 1e-05
    %v279 = vadd.f32 %v275, 1e-05
    %v280 = vadd.f32 %v276, 1e-05
    %v281 = vrsqrt.pop %v277
    %v282 = vrsqrt.pop %v278
    %v283 = vrsqrt.pop %v279
    %v284 = vrsqrt.pop %v280
    %v289 = vcombine.low %v281, %v282
    %v290 = vcombine.low %v283, %v284
    %v292 = vunpack.c.l.s4 1966171168
    %v293 = vunpack.c.0.s8 %v292
    %v294 = vlaneseq
    %v295 = vshrl.u32 %v294, 7
    %v296 = vsub.s32 %v293, %v295
    %v297 = vrot.slane %v289, %v296
    %v299 = vunpack.c.l.s4 1966171168
    %v300 = vunpack.c.0.s8 %v299
    %v301 = vlaneseq
    %v302 = vshrl.u32 %v301, 7
    %v303 = vsub.s32 %v300, %v302
    %v304 = vrot.slane %v290, %v303
    %v305 = vcombine.low %v297, %v304
    %v307 = vunpack.c.l.s4 1966171168
    %v308 = vunpack.c.0.s8 %v307
    %v309 = vlaneseq
    %v310 = vshrl.u32 %v309, 7
    %v311 = vsub.s32 %v308, %v310
    %v312 = vrot.slane %v305, %v311
    %v314 = vmul.f32 %v207, %v312
    %v316 = vlaneseq
    %v317 = vshrl.u32 %v316, 7
    %v318 = vsub.s32 0, %v317
    %v319 = vrot.slane %v314, %v318
    %v320 = vlaneseq
    %v321 = vshrl.u32 %v320, 7
    %v322 = vsub.s32 1, %v321
    %v323 = vrot.slane %v314, %v322
    %v324 = vlaneseq
    %v325 = vshrl.u32 %v324, 7
    %v326 = vsub.s32 2, %v325
    %v327 = vrot.slane %v314, %v326
    %v328 = vlaneseq
    %v329 = vshrl.u32 %v328, 7
    %v330 = vsub.s32 3, %v329
    %v331 = vrot.slane %v314, %v330
    %v336 = vmul.f32 %v261, %v319
    %v337 = vmul.f32 %v262, %v323
    %v338 = vmul.f32 %v263, %v327
    %v339 = vmul.f32 %v264, %v331
    %v344 = vcombine.low %v336, %v337
    %v345 = vcombine.low %v338, %v339
    %v347 = vunpack.c.l.s4 1966171168
    %v348 = vunpack.c.0.s8 %v347
    %v349 = vlaneseq
    %v350 = vshrl.u32 %v349, 7
    %v351 = vsub.s32 %v348, %v350
    %v352 = vrot.slane %v344, %v351
    %v354 = vunpack.c.l.s4 1966171168
    %v355 = vunpack.c.0.s8 %v354
    %v356 = vlaneseq
    %v357 = vshrl.u32 %v356, 7
    %v358 = vsub.s32 %v355, %v357
    %v359 = vrot.slane %v345, %v358
    %v360 = vcombine.low %v352, %v359
    %v362 = vunpack.c.l.s4 1966171168
    %v363 = vunpack.c.0.s8 %v362
    %v364 = vlaneseq
    %v365 = vshrl.u32 %v364, 7
    %v366 = vsub.s32 %v363, %v365
    %v367 = vrot.slane %v360, %v366
    %v369 = vsub.f32 %v208, %v367
    %v370 = vmul.f32 %v160, %v319
    %v371 = vmul.f32 %v162, %v323
    %v372 = vmul.f32 %v201, %v327
    %v373 = vmul.f32 %v203, %v331
    %v375 = vlaneseq
    %v376 = vshrl.u32 %v375, 7
    %v377 = vsub.s32 0, %v376
    %v378 = vrot.slane %v369, %v377
    %v379 = vlaneseq
    %v380 = vshrl.u32 %v379, 7
    %v381 = vsub.s32 1, %v380
    %v382 = vrot.slane %v369, %v381
    %v383 = vlaneseq
    %v384 = vshrl.u32 %v383, 7
    %v385 = vsub.s32 2, %v384
    %v386 = vrot.slane %v369, %v385
    %v387 = vlaneseq
    %v388 = vshrl.u32 %v387, 7
    %v389 = vsub.s32 3, %v388
    %v390 = vrot.slane %v369, %v389
    %v395 = vadd.f32 %v370, %v378
    %v396 = vadd.f32 %v371, %v382
    %v397 = vadd.f32 %v372, %v386
    %v398 = vadd.f32 %v373, %v390
    %v399 = vmul.f32 %v395, 0.01
    %v400 = vmul.f32 %v396, 0.01
    %v401 = vmul.f32 %v397, 0.01
    %v402 = vmul.f32 %v398, 0.01
    %v403 = vmax.f32 %v395, %v399
    %v404 = vmax.f32 %v396, %v400
    %v405 = vmax.f32 %v397, %v401
    %v406 = vmax.f32 %v398, %v402
    %408 = vset.pattern.permute.xlu0 0
    %409 = vperm.xlu0 %408, %v87
    %v410 = vpop.permute.xlu0 %409
    %v412 = vmul.f32 %v403, %v410
    %v413 = vmul.f32 %v404, %v410
    %v414 = vmul.f32 %v405, %v410
    %v415 = vmul.f32 %v406, %v410
    %v416 = vpack.c.bf16 %v412, %v412
    %v417 = vpack.c.bf16 %v413, %v413
    %v418 = vpack.c.bf16 %v414, %v414
    %v419 = vpack.c.bf16 %v415, %v415
    %v420 = vld [vmem:[#allocation2] sm:$0xff]
    %v421 = vld [vmem:[#allocation2 + $0x8] sm:$0xff]
    %v422 = vld [vmem:[#allocation2 + $0x10] sm:$0xff]
    %v423 = vld [vmem:[#allocation2 + $0x18] sm:$0xff]
    %v424 = vld [vmem:[#allocation2 + $0x20] sm:$0xff]
    %v425 = vld [vmem:[#allocation2 + $0x28] sm:$0xff]
    %v426 = vld [vmem:[#allocation2 + $0x30] sm:$0xff]
    %v427 = vld [vmem:[#allocation2 + $0x38] sm:$0xff]
    %v428 = vld [vmem:[#allocation2 + $0x40] sm:$0xff]
    %v429 = vld [vmem:[#allocation2 + $0x48] sm:$0xff]
    %v430 = vld [vmem:[#allocation2 + $0x50] sm:$0xff]
    %v431 = vld [vmem:[#allocation2 + $0x58] sm:$0xff]
    %v432 = vld [vmem:[#allocation2 + $0x60] sm:$0xff]
    %v433 = vld [vmem:[#allocation2 + $0x68] sm:$0xff]
    %v434 = vld [vmem:[#allocation2 + $0x70] sm:$0xff]
    %v435 = vld [vmem:[#allocation2 + $0x78] sm:$0xff]
    %v436 = vld [vmem:[#allocation2 + $0x80] sm:$0xff]
    %v437 = vld [vmem:[#allocation2 + $0x88] sm:$0xff]
    %v438 = vld [vmem:[#allocation2 + $0x90] sm:$0xff]
    %v439 = vld [vmem:[#allocation2 + $0x98] sm:$0xff]
    %v440 = vld [vmem:[#allocation2 + $0xa0] sm:$0xff]
    %v441 = vld [vmem:[#allocation2 + $0xa8] sm:$0xff]
    %v442 = vld [vmem:[#allocation2 + $0xb0] sm:$0xff]
    %v443 = vld [vmem:[#allocation2 + $0xb8] sm:$0xff]
    %v444 = vld [vmem:[#allocation2 + $0xc0] sm:$0xff]
    %v445 = vld [vmem:[#allocation2 + $0xc8] sm:$0xff]
    %v446 = vld [vmem:[#allocation2 + $0xd0] sm:$0xff]
    %v447 = vld [vmem:[#allocation2 + $0xd8] sm:$0xff]
    %v448 = vld [vmem:[#allocation2 + $0xe0] sm:$0xff]
    %v449 = vld [vmem:[#allocation2 + $0xe8] sm:$0xff]
    %v450 = vld [vmem:[#allocation2 + $0xf0] sm:$0xff]
    %v451 = vld [vmem:[#allocation2 + $0xf8] sm:$0xff]
    %v452 = vld [vmem:[#allocation2 + $0x100] sm:$0xff]
    %v453 = vld [vmem:[#allocation2 + $0x108] sm:$0xff]
    %v454 = vld [vmem:[#allocation2 + $0x110] sm:$0xff]
    %v455 = vld [vmem:[#allocation2 + $0x118] sm:$0xff]
    %v456 = vld [vmem:[#allocation2 + $0x120] sm:$0xff]
    %v457 = vld [vmem:[#allocation2 + $0x128] sm:$0xff]
    %v458 = vld [vmem:[#allocation2 + $0x130] sm:$0xff]
    %v459 = vld [vmem:[#allocation2 + $0x138] sm:$0xff]
    %v460 = vld [vmem:[#allocation2 + $0x140] sm:$0xff]
    %v461 = vld [vmem:[#allocation2 + $0x148] sm:$0xff]
    %v462 = vld [vmem:[#allocation2 + $0x150] sm:$0xff]
    %v463 = vld [vmem:[#allocation2 + $0x158] sm:$0xff]
    %v464 = vld [vmem:[#allocation2 + $0x160] sm:$0xff]
    %v465 = vld [vmem:[#allocation2 + $0x168] sm:$0xff]
    %v466 = vld [vmem:[#allocation2 + $0x170] sm:$0xff]
    %v467 = vld [vmem:[#allocation2 + $0x178] sm:$0xff]
    %v468 = vld [vmem:[#allocation2 + $0x180] sm:$0xff]
    %v469 = vld [vmem:[#allocation2 + $0x188] sm:$0xff]
    %v470 = vld [vmem:[#allocation2 + $0x190] sm:$0xff]
    %v471 = vld [vmem:[#allocation2 + $0x198] sm:$0xff]
    %v472 = vld [vmem:[#allocation2 + $0x1a0] sm:$0xff]
    %v473 = vld [vmem:[#allocation2 + $0x1a8] sm:$0xff]
    %v474 = vld [vmem:[#allocation2 + $0x1b0] sm:$0xff]
    %v475 = vld [vmem:[#allocation2 + $0x1b8] sm:$0xff]
    %v476 = vld [vmem:[#allocation2 + $0x1c0] sm:$0xff]
    %v477 = vld [vmem:[#allocation2 + $0x1c8] sm:$0xff]
    %v478 = vld [vmem:[#allocation2 + $0x1d0] sm:$0xff]
    %v479 = vld [vmem:[#allocation2 + $0x1d8] sm:$0xff]
    %v480 = vld [vmem:[#allocation2 + $0x1e0] sm:$0xff]
    %v481 = vld [vmem:[#allocation2 + $0x1e8] sm:$0xff]
    %v482 = vld [vmem:[#allocation2 + $0x1f0] sm:$0xff]
    %v483 = vld [vmem:[#allocation2 + $0x1f8] sm:$0xff]
    %v484 = vld [vmem:[#allocation2 + $0x200] sm:$0xff]
    %v485 = vld [vmem:[#allocation2 + $0x208] sm:$0xff]
    %v486 = vld [vmem:[#allocation2 + $0x210] sm:$0xff]
    %v487 = vld [vmem:[#allocation2 + $0x218] sm:$0xff]
    %v488 = vld [vmem:[#allocation2 + $0x220] sm:$0xff]
    %v489 = vld [vmem:[#allocation2 + $0x228] sm:$0xff]
    %v490 = vld [vmem:[#allocation2 + $0x230] sm:$0xff]
    %v491 = vld [vmem:[#allocation2 + $0x238] sm:$0xff]
    %v492 = vld [vmem:[#allocation2 + $0x240] sm:$0xff]
    %v493 = vld [vmem:[#allocation2 + $0x248] sm:$0xff]
    %v494 = vld [vmem:[#allocation2 + $0x250] sm:$0xff]
    %v495 = vld [vmem:[#allocation2 + $0x258] sm:$0xff]
    %v496 = vld [vmem:[#allocation2 + $0x260] sm:$0xff]
    %v497 = vld [vmem:[#allocation2 + $0x268] sm:$0xff]
    %v498 = vld [vmem:[#allocation2 + $0x270] sm:$0xff]
    %v499 = vld [vmem:[#allocation2 + $0x278] sm:$0xff]
    %v500 = vld [vmem:[#allocation2 + $0x280] sm:$0xff]
    %v501 = vld [vmem:[#allocation2 + $0x288] sm:$0xff]
    %v502 = vld [vmem:[#allocation2 + $0x290] sm:$0xff]
    %v503 = vld [vmem:[#allocation2 + $0x298] sm:$0xff]
    %v504 = vld [vmem:[#allocation2 + $0x2a0] sm:$0xff]
    %v505 = vld [vmem:[#allocation2 + $0x2a8] sm:$0xff]
    %v506 = vld [vmem:[#allocation2 + $0x2b0] sm:$0xff]
    %v507 = vld [vmem:[#allocation2 + $0x2b8] sm:$0xff]
    %v508 = vld [vmem:[#allocation2 + $0x2c0] sm:$0xff]
    %v509 = vld [vmem:[#allocation2 + $0x2c8] sm:$0xff]
    %v510 = vld [vmem:[#allocation2 + $0x2d0] sm:$0xff]
    %v511 = vld [vmem:[#allocation2 + $0x2d8] sm:$0xff]
    %v512 = vld [vmem:[#allocation2 + $0x2e0] sm:$0xff]
    %v513 = vld [vmem:[#allocation2 + $0x2e8] sm:$0xff]
    %v514 = vld [vmem:[#allocation2 + $0x2f0] sm:$0xff]
    %v515 = vld [vmem:[#allocation2 + $0x2f8] sm:$0xff]
    %v516 = vld [vmem:[#allocation2 + $0x300] sm:$0xff]
    %v517 = vld [vmem:[#allocation2 + $0x308] sm:$0xff]
    %v518 = vld [vmem:[#allocation2 + $0x310] sm:$0xff]
    %v519 = vld [vmem:[#allocation2 + $0x318] sm:$0xff]
    %v520 = vld [vmem:[#allocation2 + $0x320] sm:$0xff]
    %v521 = vld [vmem:[#allocation2 + $0x328] sm:$0xff]
    %v522 = vld [vmem:[#allocation2 + $0x330] sm:$0xff]
    %v523 = vld [vmem:[#allocation2 + $0x338] sm:$0xff]
    %v524 = vld [vmem:[#allocation2 + $0x340] sm:$0xff]
    %v525 = vld [vmem:[#allocation2 + $0x348] sm:$0xff]
    %v526 = vld [vmem:[#allocation2 + $0x350] sm:$0xff]
    %v527 = vld [vmem:[#allocation2 + $0x358] sm:$0xff]
    %v528 = vld [vmem:[#allocation2 + $0x360] sm:$0xff]
    %v529 = vld [vmem:[#allocation2 + $0x368] sm:$0xff]
    %v530 = vld [vmem:[#allocation2 + $0x370] sm:$0xff]
    %v531 = vld [vmem:[#allocation2 + $0x378] sm:$0xff]
    %v532 = vld [vmem:[#allocation2 + $0x380] sm:$0xff]
    %v533 = vld [vmem:[#allocation2 + $0x388] sm:$0xff]
    %v534 = vld [vmem:[#allocation2 + $0x390] sm:$0xff]
    %v535 = vld [vmem:[#allocation2 + $0x398] sm:$0xff]
    %v536 = vld [vmem:[#allocation2 + $0x3a0] sm:$0xff]
    %v537 = vld [vmem:[#allocation2 + $0x3a8] sm:$0xff]
    %v538 = vld [vmem:[#allocation2 + $0x3b0] sm:$0xff]
    %v539 = vld [vmem:[#allocation2 + $0x3b8] sm:$0xff]
    %v540 = vld [vmem:[#allocation2 + $0x3c0] sm:$0xff]
    %v541 = vld [vmem:[#allocation2 + $0x3c8] sm:$0xff]
    %v542 = vld [vmem:[#allocation2 + $0x3d0] sm:$0xff]
    %v543 = vld [vmem:[#allocation2 + $0x3d8] sm:$0xff]
    %v544 = vld [vmem:[#allocation2 + $0x3e0] sm:$0xff]
    %v545 = vld [vmem:[#allocation2 + $0x3e8] sm:$0xff]
    %v546 = vld [vmem:[#allocation2 + $0x3f0] sm:$0xff]
    %v547 = vld [vmem:[#allocation2 + $0x3f8] sm:$0xff]
    %v676 = vunpack.c.l.b16 %v420
    %v677 = vunpack.c.h.b16 %v420
    %v678 = vunpack.c.l.b16 %v421
    %v679 = vunpack.c.h.b16 %v421
    %v680 = vunpack.c.l.b16 %v422
    %v681 = vunpack.c.h.b16 %v422
    %v682 = vunpack.c.l.b16 %v423
    %v683 = vunpack.c.h.b16 %v423
    %v684 = vunpack.c.l.b16 %v424
    %v685 = vunpack.c.h.b16 %v424
    %v686 = vunpack.c.l.b16 %v425
    %v687 = vunpack.c.h.b16 %v425
    %v688 = vunpack.c.l.b16 %v426
    %v689 = vunpack.c.h.b16 %v426
    %v690 = vunpack.c.l.b16 %v427
    %v691 = vunpack.c.h.b16 %v427
    %v692 = vunpack.c.l.b16 %v428
    %v693 = vunpack.c.h.b16 %v428
    %v694 = vunpack.c.l.b16 %v429
    %v695 = vunpack.c.h.b16 %v429
    %v696 = vunpack.c.l.b16 %v430
    %v697 = vunpack.c.h.b16 %v430
    %v698 = vunpack.c.l.b16 %v431
    %v699 = vunpack.c.h.b16 %v431
    %v700 = vunpack.c.l.b16 %v432
    %v701 = vunpack.c.h.b16 %v432
    %v702 = vunpack.c.l.b16 %v433
    %v703 = vunpack.c.h.b16 %v433
    %v704 = vunpack.c.l.b16 %v434
    %v705 = vunpack.c.h.b16 %v434
    %v706 = vunpack.c.l.b16 %v435
    %v707 = vunpack.c.h.b16 %v435
    %v708 = vunpack.c.l.b16 %v436
    %v709 = vunpack.c.h.b16 %v436
    %v710 = vunpack.c.l.b16 %v437
    %v711 = vunpack.c.h.b16 %v437
    %v712 = vunpack.c.l.b16 %v438
    %v713 = vunpack.c.h.b16 %v438
    %v714 = vunpack.c.l.b16 %v439
    %v715 = vunpack.c.h.b16 %v439
    %v716 = vunpack.c.l.b16 %v440
    %v717 = vunpack.c.h.b16 %v440
    %v718 = vunpack.c.l.b16 %v441
    %v719 = vunpack.c.h.b16 %v441
    %v720 = vunpack.c.l.b16 %v442
    %v721 = vunpack.c.h.b16 %v442
    %v722 = vunpack.c.l.b16 %v443
    %v723 = vunpack.c.h.b16 %v443
    %v724 = vunpack.c.l.b16 %v444
    %v725 = vunpack.c.h.b16 %v444
    %v726 = vunpack.c.l.b16 %v445
    %v727 = vunpack.c.h.b16 %v445
    %v728 = vunpack.c.l.b16 %v446
    %v729 = vunpack.c.h.b16 %v446
    %v730 = vunpack.c.l.b16 %v447
    %v731 = vunpack.c.h.b16 %v447
    %v732 = vunpack.c.l.b16 %v448
    %v733 = vunpack.c.h.b16 %v448
    %v734 = vunpack.c.l.b16 %v449
    %v735 = vunpack.c.h.b16 %v449
    %v736 = vunpack.c.l.b16 %v450
    %v737 = vunpack.c.h.b16 %v450
    %v738 = vunpack.c.l.b16 %v451
    %v739 = vunpack.c.h.b16 %v451
    %v740 = vunpack.c.l.b16 %v452
    %v741 = vunpack.c.h.b16 %v452
    %v742 = vunpack.c.l.b16 %v453
    %v743 = vunpack.c.h.b16 %v453
    %v744 = vunpack.c.l.b16 %v454
    %v745 = vunpack.c.h.b16 %v454
    %v746 = vunpack.c.l.b16 %v455
    %v747 = vunpack.c.h.b16 %v455
    %v748 = vunpack.c.l.b16 %v456
    %v749 = vunpack.c.h.b16 %v456
    %v750 = vunpack.c.l.b16 %v457
    %v751 = vunpack.c.h.b16 %v457
    %v752 = vunpack.c.l.b16 %v458
    %v753 = vunpack.c.h.b16 %v458
    %v754 = vunpack.c.l.b16 %v459
    %v755 = vunpack.c.h.b16 %v459
    %v756 = vunpack.c.l.b16 %v460
    %v757 = vunpack.c.h.b16 %v460
    %v758 = vunpack.c.l.b16 %v461
    %v759 = vunpack.c.h.b16 %v461
    %v760 = vunpack.c.l.b16 %v462
    %v761 = vunpack.c.h.b16 %v462
    %v762 = vunpack.c.l.b16 %v463
    %v763 = vunpack.c.h.b16 %v463
    %v764 = vunpack.c.l.b16 %v464
    %v765 = vunpack.c.h.b16 %v464
    %v766 = vunpack.c.l.b16 %v465
    %v767 = vunpack.c.h.b16 %v465
    %v768 = vunpack.c.l.b16 %v466
    %v769 = vunpack.c.h.b16 %v466
    %v770 = vunpack.c.l.b16 %v467
    %v771 = vunpack.c.h.b16 %v467
    %v772 = vunpack.c.l.b16 %v468
    %v773 = vunpack.c.h.b16 %v468
    %v774 = vunpack.c.l.b16 %v469
    %v775 = vunpack.c.h.b16 %v469
    %v776 = vunpack.c.l.b16 %v470
    %v777 = vunpack.c.h.b16 %v470
    %v778 = vunpack.c.l.b16 %v471
    %v779 = vunpack.c.h.b16 %v471
    %v780 = vunpack.c.l.b16 %v472
    %v781 = vunpack.c.h.b16 %v472
    %v782 = vunpack.c.l.b16 %v473
    %v783 = vunpack.c.h.b16 %v473
    %v784 = vunpack.c.l.b16 %v474
    %v785 = vunpack.c.h.b16 %v474
    %v786 = vunpack.c.l.b16 %v475
    %v787 = vunpack.c.h.b16 %v475
    %v788 = vunpack.c.l.b16 %v476
    %v789 = vunpack.c.h.b16 %v476
    %v790 = vunpack.c.l.b16 %v477
    %v791 = vunpack.c.h.b16 %v477
    %v792 = vunpack.c.l.b16 %v478
    %v793 = vunpack.c.h.b16 %v478
    %v794 = vunpack.c.l.b16 %v479
    %v795 = vunpack.c.h.b16 %v479
    %v796 = vunpack.c.l.b16 %v480
    %v797 = vunpack.c.h.b16 %v480
    %v798 = vunpack.c.l.b16 %v481
    %v799 = vunpack.c.h.b16 %v481
    %v800 = vunpack.c.l.b16 %v482
    %v801 = vunpack.c.h.b16 %v482
    %v802 = vunpack.c.l.b16 %v483
    %v803 = vunpack.c.h.b16 %v483
    %v804 = vunpack.c.l.b16 %v484
    %v805 = vunpack.c.h.b16 %v484
    %v806 = vunpack.c.l.b16 %v485
    %v807 = vunpack.c.h.b16 %v485
    %v808 = vunpack.c.l.b16 %v486
    %v809 = vunpack.c.h.b16 %v486
    %v810 = vunpack.c.l.b16 %v487
    %v811 = vunpack.c.h.b16 %v487
    %v812 = vunpack.c.l.b16 %v488
    %v813 = vunpack.c.h.b16 %v488
    %v814 = vunpack.c.l.b16 %v489
    %v815 = vunpack.c.h.b16 %v489
    %v816 = vunpack.c.l.b16 %v490
    %v817 = vunpack.c.h.b16 %v490
    %v818 = vunpack.c.l.b16 %v491
    %v819 = vunpack.c.h.b16 %v491
    %v820 = vunpack.c.l.b16 %v492
    %v821 = vunpack.c.h.b16 %v492
    %v822 = vunpack.c.l.b16 %v493
    %v823 = vunpack.c.h.b16 %v493
    %v824 = vunpack.c.l.b16 %v494
    %v825 = vunpack.c.h.b16 %v494
    %v826 = vunpack.c.l.b16 %v495
    %v827 = vunpack.c.h.b16 %v495
    %v828 = vunpack.c.l.b16 %v496
    %v829 = vunpack.c.h.b16 %v496
    %v830 = vunpack.c.l.b16 %v497
    %v831 = vunpack.c.h.b16 %v497
    %v832 = vunpack.c.l.b16 %v498
    %v833 = vunpack.c.h.b16 %v498
    %v834 = vunpack.c.l.b16 %v499
    %v835 = vunpack.c.h.b16 %v499
    %v836 = vunpack.c.l.b16 %v500
    %v837 = vunpack.c.h.b16 %v500
    %v838 = vunpack.c.l.b16 %v501
    %v839 = vunpack.c.h.b16 %v501
    %v840 = vunpack.c.l.b16 %v502
    %v841 = vunpack.c.h.b16 %v502
    %v842 = vunpack.c.l.b16 %v503
    %v843 = vunpack.c.h.b16 %v503
    %v844 = vunpack.c.l.b16 %v504
    %v845 = vunpack.c.h.b16 %v504
    %v846 = vunpack.c.l.b16 %v505
    %v847 = vunpack.c.h.b16 %v505
    %v848 = vunpack.c.l.b16 %v506
    %v849 = vunpack.c.h.b16 %v506
    %v850 = vunpack.c.l.b16 %v507
    %v851 = vunpack.c.h.b16 %v507
    %v852 = vunpack.c.l.b16 %v508
    %v853 = vunpack.c.h.b16 %v508
    %v854 = vunpack.c.l.b16 %v509
    %v855 = vunpack.c.h.b16 %v509
    %v856 = vunpack.c.l.b16 %v510
    %v857 = vunpack.c.h.b16 %v510
    %v858 = vunpack.c.l.b16 %v511
    %v859 = vunpack.c.h.b16 %v511
    %v860 = vunpack.c.l.b16 %v512
    %v861 = vunpack.c.h.b16 %v512
    %v862 = vunpack.c.l.b16 %v513
    %v863 = vunpack.c.h.b16 %v513
    %v864 = vunpack.c.l.b16 %v514
    %v865 = vunpack.c.h.b16 %v514
    %v866 = vunpack.c.l.b16 %v515
    %v867 = vunpack.c.h.b16 %v515
    %v868 = vunpack.c.l.b16 %v516
    %v869 = vunpack.c.h.b16 %v516
    %v870 = vunpack.c.l.b16 %v517
    %v871 = vunpack.c.h.b16 %v517
    %v872 = vunpack.c.l.b16 %v518
    %v873 = vunpack.c.h.b16 %v518
    %v874 = vunpack.c.l.b16 %v519
    %v875 = vunpack.c.h.b16 %v519
    %v876 = vunpack.c.l.b16 %v520
    %v877 = vunpack.c.h.b16 %v520
    %v878 = vunpack.c.l.b16 %v521
    %v879 = vunpack.c.h.b16 %v521
    %v880 = vunpack.c.l.b16 %v522
    %v881 = vunpack.c.h.b16 %v522
    %v882 = vunpack.c.l.b16 %v523
    %v883 = vunpack.c.h.b16 %v523
    %v884 = vunpack.c.l.b16 %v524
    %v885 = vunpack.c.h.b16 %v524
    %v886 = vunpack.c.l.b16 %v525
    %v887 = vunpack.c.h.b16 %v525
    %v888 = vunpack.c.l.b16 %v526
    %v889 = vunpack.c.h.b16 %v526
    %v890 = vunpack.c.l.b16 %v527
    %v891 = vunpack.c.h.b16 %v527
    %v892 = vunpack.c.l.b16 %v528
    %v893 = vunpack.c.h.b16 %v528
    %v894 = vunpack.c.l.b16 %v529
    %v895 = vunpack.c.h.b16 %v529
    %v896 = vunpack.c.l.b16 %v530
    %v897 = vunpack.c.h.b16 %v530
    %v898 = vunpack.c.l.b16 %v531
    %v899 = vunpack.c.h.b16 %v531
    %v900 = vunpack.c.l.b16 %v532
    %v901 = vunpack.c.h.b16 %v532
    %v902 = vunpack.c.l.b16 %v533
    %v903 = vunpack.c.h.b16 %v533
    %v904 = vunpack.c.l.b16 %v534
    %v905 = vunpack.c.h.b16 %v534
    %v906 = vunpack.c.l.b16 %v535
    %v907 = vunpack.c.h.b16 %v535
    %v908 = vunpack.c.l.b16 %v536
    %v909 = vunpack.c.h.b16 %v536
    %v910 = vunpack.c.l.b16 %v537
    %v911 = vunpack.c.h.b16 %v537
    %v912 = vunpack.c.l.b16 %v538
    %v913 = vunpack.c.h.b16 %v538
    %v914 = vunpack.c.l.b16 %v539
    %v915 = vunpack.c.h.b16 %v539
    %v916 = vunpack.c.l.b16 %v540
    %v917 = vunpack.c.h.b16 %v540
    %v918 = vunpack.c.l.b16 %v541
    %v919 = vunpack.c.h.b16 %v541
    %v920 = vunpack.c.l.b16 %v542
    %v921 = vunpack.c.h.b16 %v542
    %v922 = vunpack.c.l.b16 %v543
    %v923 = vunpack.c.h.b16 %v543
    %v924 = vunpack.c.l.b16 %v544
    %v925 = vunpack.c.h.b16 %v544
    %v926 = vunpack.c.l.b16 %v545
    %v927 = vunpack.c.h.b16 %v545
    %v928 = vunpack.c.l.b16 %v546
    %v929 = vunpack.c.h.b16 %v546
    %v930 = vunpack.c.l.b16 %v547
    %v931 = vunpack.c.h.b16 %v547
    %v932 = vpack.c.b16 %v680, %v676
    %v933 = vpack.c.b16 %v681, %v677
    %v934 = vpack.c.b16 %v682, %v678
    %v935 = vpack.c.b16 %v683, %v679
    %v936 = vpack.c.b16 %v688, %v684
    %v937 = vpack.c.b16 %v689, %v685
    %v938 = vpack.c.b16 %v690, %v686
    %v939 = vpack.c.b16 %v691, %v687
    %v940 = vpack.c.b16 %v696, %v692
    %v941 = vpack.c.b16 %v697, %v693
    %v942 = vpack.c.b16 %v698, %v694
    %v943 = vpack.c.b16 %v699, %v695
    %v944 = vpack.c.b16 %v704, %v700
    %v945 = vpack.c.b16 %v705, %v701
    %v946 = vpack.c.b16 %v706, %v702
    %v947 = vpack.c.b16 %v707, %v703
    %v948 = vpack.c.b16 %v712, %v708
    %v949 = vpack.c.b16 %v713, %v709
    %v950 = vpack.c.b16 %v714, %v710
    %v951 = vpack.c.b16 %v715, %v711
    %v952 = vpack.c.b16 %v720, %v716
    %v953 = vpack.c.b16 %v721, %v717
    %v954 = vpack.c.b16 %v722, %v718
    %v955 = vpack.c.b16 %v723, %v719
    %v956 = vpack.c.b16 %v728, %v724
    %v957 = vpack.c.b16 %v729, %v725
    %v958 = vpack.c.b16 %v730, %v726
    %v959 = vpack.c.b16 %v731, %v727
    %v960 = vpack.c.b16 %v736, %v732
    %v961 = vpack.c.b16 %v737, %v733
    %v962 = vpack.c.b16 %v738, %v734
    %v963 = vpack.c.b16 %v739, %v735
    %v964 = vpack.c.b16 %v744, %v740
    %v965 = vpack.c.b16 %v745, %v741
    %v966 = vpack.c.b16 %v746, %v742
    %v967 = vpack.c.b16 %v747, %v743
    %v968 = vpack.c.b16 %v752, %v748
    %v969 = vpack.c.b16 %v753, %v749
    %v970 = vpack.c.b16 %v754, %v750
    %v971 = vpack.c.b16 %v755, %v751
    %v972 = vpack.c.b16 %v760, %v756
    %v973 = vpack.c.b16 %v761, %v757
    %v974 = vpack.c.b16 %v762, %v758
    %v975 = vpack.c.b16 %v763, %v759
    %v976 = vpack.c.b16 %v768, %v764
    %v977 = vpack.c.b16 %v769, %v765
    %v978 = vpack.c.b16 %v770, %v766
    %v979 = vpack.c.b16 %v771, %v767
    %v980 = vpack.c.b16 %v776, %v772
    %v981 = vpack.c.b16 %v777, %v773
    %v982 = vpack.c.b16 %v778, %v774
    %v983 = vpack.c.b16 %v779, %v775
    %v984 = vpack.c.b16 %v784, %v780
    %v985 = vpack.c.b16 %v785, %v781
    %v986 = vpack.c.b16 %v786, %v782
    %v987 = vpack.c.b16 %v787, %v783
    %v988 = vpack.c.b16 %v792, %v788
    %v989 = vpack.c.b16 %v793, %v789
    %v990 = vpack.c.b16 %v794, %v790
    %v991 = vpack.c.b16 %v795, %v791
    %v992 = vpack.c.b16 %v800, %v796
    %v993 = vpack.c.b16 %v801, %v797
    %v994 = vpack.c.b16 %v802, %v798
    %v995 = vpack.c.b16 %v803, %v799
    %v996 = vpack.c.b16 %v808, %v804
    %v997 = vpack.c.b16 %v809, %v805
    %v998 = vpack.c.b16 %v810, %v806
    %v999 = vpack.c.b16 %v811, %v807
    %v1000 = vpack.c.b16 %v816, %v812
    %v1001 = vpack.c.b16 %v817, %v813
    %v1002 = vpack.c.b16 %v818, %v814
    %v1003 = vpack.c.b16 %v819, %v815
    %v1004 = vpack.c.b16 %v824, %v820
    %v1005 = vpack.c.b16 %v825, %v821
    %v1006 = vpack.c.b16 %v826, %v822
    %v1007 = vpack.c.b16 %v827, %v823
    %v1008 = vpack.c.b16 %v832, %v828
    %v1009 = vpack.c.b16 %v833, %v829
    %v1010 = vpack.c.b16 %v834, %v830
    %v1011 = vpack.c.b16 %v835, %v831
    %v1012 = vpack.c.b16 %v840, %v836
    %v1013 = vpack.c.b16 %v841, %v837
    %v1014 = vpack.c.b16 %v842, %v838
    %v1015 = vpack.c.b16 %v843, %v839
    %v1016 = vpack.c.b16 %v848, %v844
    %v1017 = vpack.c.b16 %v849, %v845
    %v1018 = vpack.c.b16 %v850, %v846
    %v1019 = vpack.c.b16 %v851, %v847
    %v1020 = vpack.c.b16 %v856, %v852
    %v1021 = vpack.c.b16 %v857, %v853
    %v1022 = vpack.c.b16 %v858, %v854
    %v1023 = vpack.c.b16 %v859, %v855
    %v1024 = vpack.c.b16 %v864, %v860
    %v1025 = vpack.c.b16 %v865, %v861
    %v1026 = vpack.c.b16 %v866, %v862
    %v1027 = vpack.c.b16 %v867, %v863
    %v1028 = vpack.c.b16 %v872, %v868
    %v1029 = vpack.c.b16 %v873, %v869
    %v1030 = vpack.c.b16 %v874, %v870
    %v1031 = vpack.c.b16 %v875, %v871
    %v1032 = vpack.c.b16 %v880, %v876
    %v1033 = vpack.c.b16 %v881, %v877
    %v1034 = vpack.c.b16 %v882, %v878
    %v1035 = vpack.c.b16 %v883, %v879
    %v1036 = vpack.c.b16 %v888, %v884
    %v1037 = vpack.c.b16 %v889, %v885
    %v1038 = vpack.c.b16 %v890, %v886
    %v1039 = vpack.c.b16 %v891, %v887
    %v1040 = vpack.c.b16 %v896, %v892
    %v1041 = vpack.c.b16 %v897, %v893
    %v1042 = vpack.c.b16 %v898, %v894
    %v1043 = vpack.c.b16 %v899, %v895
    %v1044 = vpack.c.b16 %v904, %v900
    %v1045 = vpack.c.b16 %v905, %v901
    %v1046 = vpack.c.b16 %v906, %v902
    %v1047 = vpack.c.b16 %v907, %v903
    %v1048 = vpack.c.b16 %v912, %v908
    %v1049 = vpack.c.b16 %v913, %v909
    %v1050 = vpack.c.b16 %v914, %v910
    %v1051 = vpack.c.b16 %v915, %v911
    %v1052 = vpack.c.b16 %v920, %v916
    %v1053 = vpack.c.b16 %v921, %v917
    %v1054 = vpack.c.b16 %v922, %v918
    %v1055 = vpack.c.b16 %v923, %v919
    %v1056 = vpack.c.b16 %v928, %v924
    %v1057 = vpack.c.b16 %v929, %v925
    %v1058 = vpack.c.b16 %v930, %v926
    %v1059 = vpack.c.b16 %v931, %v927
    %1188 = vmatprep.subr.bf16.mxu0 %v933
    %1189 = vmatpush1.bf16.msra.mxu0 %v932
    %1190 = vmatprep.subr.bf16.mxu0 %v937
    %1191 = vmatpush1.bf16.msra.mxu0 %v936
    %1192 = vmatprep.subr.bf16.mxu0 %v941
    %1193 = vmatpush1.bf16.msra.mxu0 %v940
    %1194 = vmatprep.subr.bf16.mxu0 %v945
    %1195 = vmatpush1.bf16.msra.mxu0 %v944
    %1196 = vmatprep.subr.bf16.mxu0 %v949
    %1197 = vmatpush1.bf16.msra.mxu0 %v948
    %1198 = vmatprep.subr.bf16.mxu0 %v953
    %1199 = vmatpush1.bf16.msra.mxu0 %v952
    %1200 = vmatprep.subr.bf16.mxu0 %v957
    %1201 = vmatpush1.bf16.msra.mxu0 %v956
    %1202 = vmatprep.subr.bf16.mxu0 %v961
    %1203 = vmatpush1.bf16.msra.mxu0 %v960
    %1204 = vmatprep.subr.bf16.mxu0 %v965
    %1205 = vmatpush1.bf16.msra.mxu0 %v964
    %1206 = vmatprep.subr.bf16.mxu0 %v969
    %1207 = vmatpush1.bf16.msra.mxu0 %v968
    %1208 = vmatprep.subr.bf16.mxu0 %v973
    %1209 = vmatpush1.bf16.msra.mxu0 %v972
    %1210 = vmatprep.subr.bf16.mxu0 %v977
    %1211 = vmatpush1.bf16.msra.mxu0 %v976
    %1212 = vmatprep.subr.bf16.mxu0 %v981
    %1213 = vmatpush1.bf16.msra.mxu0 %v980
    %1214 = vmatprep.subr.bf16.mxu0 %v985
    %1215 = vmatpush1.bf16.msra.mxu0 %v984
    %1216 = vmatprep.subr.bf16.mxu0 %v989
    %1217 = vmatpush1.bf16.msra.mxu0 %v988
    %1218 = vmatprep.subr.bf16.mxu0 %v993
    %1219 = vmatpush1.bf16.msra.mxu0 %v992
    %1220 = vmatprep.mubr.bf16.mxu0 %v417
    %1221 = vmatmul.mubr.bf16.gmra.mrb[0].mxu0 %v416
    %v1222 = vpop.f32.mrb[0].mxu0
    %v1223 = vadd.f32 0.0, %v1222
    %v1224 = vpop.f32.mrb[0].mxu0
    %v1225 = vadd.f32 0.0, %v1224
    %v1226 = vpop.f32.mrb[0].mxu0
    %v1227 = vpop.f32.mrb[0].mxu0
    %1228 = vdwg.mxu0
    %1229 = vmatprep.subr.bf16.mxu0 %v997
    %1230 = vmatpush1.bf16.msra.mxu0 %v996
    %1231 = vmatprep.subr.bf16.mxu0 %v1001
    %1232 = vmatpush1.bf16.msra.mxu0 %v1000
    %1233 = vmatprep.subr.bf16.mxu0 %v1005
    %1234 = vmatpush1.bf16.msra.mxu0 %v1004
    %1235 = vmatprep.subr.bf16.mxu0 %v1009
    %1236 = vmatpush1.bf16.msra.mxu0 %v1008
    %1237 = vmatprep.subr.bf16.mxu0 %v1013
    %1238 = vmatpush1.bf16.msra.mxu0 %v1012
    %1239 = vmatprep.subr.bf16.mxu0 %v1017
    %1240 = vmatpush1.bf16.msra.mxu0 %v1016
    %1241 = vmatprep.subr.bf16.mxu0 %v1021
    %1242 = vmatpush1.bf16.msra.mxu0 %v1020
    %1243 = vmatprep.subr.bf16.mxu0 %v1025
    %1244 = vmatpush1.bf16.msra.mxu0 %v1024
    %1245 = vmatprep.subr.bf16.mxu0 %v1029
    %1246 = vmatpush1.bf16.msra.mxu0 %v1028
    %1247 = vmatprep.subr.bf16.mxu0 %v1033
    %1248 = vmatpush1.bf16.msra.mxu0 %v1032
    %1249 = vmatprep.subr.bf16.mxu0 %v1037
    %1250 = vmatpush1.bf16.msra.mxu0 %v1036
    %1251 = vmatprep.subr.bf16.mxu0 %v1041
    %1252 = vmatpush1.bf16.msra.mxu0 %v1040
    %1253 = vmatprep.subr.bf16.mxu0 %v1045
    %1254 = vmatpush1.bf16.msra.mxu0 %v1044
    %1255 = vmatprep.subr.bf16.mxu0 %v1049
    %1256 = vmatpush1.bf16.msra.mxu0 %v1048
    %1257 = vmatprep.subr.bf16.mxu0 %v1053
    %1258 = vmatpush1.bf16.msra.mxu0 %v1052
    %1259 = vmatprep.subr.bf16.mxu0 %v1057
    %1260 = vmatpush1.bf16.msra.mxu0 %v1056
    %1261 = vmatprep.mubr.bf16.mxu0 %v419
    %1262 = vmatmul.mubr.bf16.gmra.mrb[0].mxu0 %v418
    %v1263 = vpop.f32.mrb[0].mxu0
    %v1264 = vadd.f32 %v1223, %v1263
    %v1265 = vpop.f32.mrb[0].mxu0
    %v1266 = vadd.f32 %v1225, %v1265
    %v1267 = vpop.f32.mrb[0].mxu0
    %v1268 = vpop.f32.mrb[0].mxu0
    %1269 = vdwg.mxu0
    %1270 = vmatprep.subr.bf16.mxu0 %v935
    %1271 = vmatpush1.bf16.msra.mxu0 %v934
    %1272 = vmatprep.subr.bf16.mxu0 %v939
    %1273 = vmatpush1.bf16.msra.mxu0 %v938
    %1274 = vmatprep.subr.bf16.mxu0 %v943
    %1275 = vmatpush1.bf16.msra.mxu0 %v942
    %1276 = vmatprep.subr.bf16.mxu0 %v947
    %1277 = vmatpush1.bf16.msra.mxu0 %v946
    %1278 = vmatprep.subr.bf16.mxu0 %v951
    %1279 = vmatpush1.bf16.msra.mxu0 %v950
    %1280 = vmatprep.subr.bf16.mxu0 %v955
    %1281 = vmatpush1.bf16.msra.mxu0 %v954
    %1282 = vmatprep.subr.bf16.mxu0 %v959
    %1283 = vmatpush1.bf16.msra.mxu0 %v958
    %1284 = vmatprep.subr.bf16.mxu0 %v963
    %1285 = vmatpush1.bf16.msra.mxu0 %v962
    %1286 = vmatprep.subr.bf16.mxu0 %v967
    %1287 = vmatpush1.bf16.msra.mxu0 %v966
    %1288 = vmatprep.subr.bf16.mxu0 %v971
    %1289 = vmatpush1.bf16.msra.mxu0 %v970
    %1290 = vmatprep.subr.bf16.mxu0 %v975
    %1291 = vmatpush1.bf16.msra.mxu0 %v974
    %1292 = vmatprep.subr.bf16.mxu0 %v979
    %1293 = vmatpush1.bf16.msra.mxu0 %v978
    %1294 = vmatprep.subr.bf16.mxu0 %v983
    %1295 = vmatpush1.bf16.msra.mxu0 %v982
    %1296 = vmatprep.subr.bf16.mxu0 %v987
    %1297 = vmatpush1.bf16.msra.mxu0 %v986
    %1298 = vmatprep.subr.bf16.mxu0 %v991
    %1299 = vmatpush1.bf16.msra.mxu0 %v990
    %1300 = vmatprep.subr.bf16.mxu0 %v995
    %1301 = vmatpush1.bf16.msra.mxu0 %v994
    %1302 = vmatprep.mubr.bf16.mxu0 %v417
    %1303 = vmatmul.mubr.bf16.gmra.mrb[0].mxu0 %v416
    %v1304 = vpop.f32.mrb[0].mxu0
    %v1305 = vadd.f32 0.0, %v1304
    %v1306 = vpop.f32.mrb[0].mxu0
    %v1307 = vadd.f32 0.0, %v1306
    %v1308 = vpop.f32.mrb[0].mxu0
    %v1309 = vpop.f32.mrb[0].mxu0
    %1310 = vdwg.mxu0
    %1311 = vmatprep.subr.bf16.mxu0 %v999
    %1312 = vmatpush1.bf16.msra.mxu0 %v998
    %1313 = vmatprep.subr.bf16.mxu0 %v1003
    %1314 = vmatpush1.bf16.msra.mxu0 %v1002
    %1315 = vmatprep.subr.bf16.mxu0 %v1007
    %1316 = vmatpush1.bf16.msra.mxu0 %v1006
    %1317 = vmatprep.subr.bf16.mxu0 %v1011
    %1318 = vmatpush1.bf16.msra.mxu0 %v1010
    %1319 = vmatprep.subr.bf16.mxu0 %v1015
    %1320 = vmatpush1.bf16.msra.mxu0 %v1014
    %1321 = vmatprep.subr.bf16.mxu0 %v1019
    %1322 = vmatpush1.bf16.msra.mxu0 %v1018
    %1323 = vmatprep.subr.bf16.mxu0 %v1023
    %1324 = vmatpush1.bf16.msra.mxu0 %v1022
    %1325 = vmatprep.subr.bf16.mxu0 %v1027
    %1326 = vmatpush1.bf16.msra.mxu0 %v1026
    %1327 = vmatprep.subr.bf16.mxu0 %v1031
    %1328 = vmatpush1.bf16.msra.mxu0 %v1030
    %1329 = vmatprep.subr.bf16.mxu0 %v1035
    %1330 = vmatpush1.bf16.msra.mxu0 %v1034
    %1331 = vmatprep.subr.bf16.mxu0 %v1039
    %1332 = vmatpush1.bf16.msra.mxu0 %v1038
    %1333 = vmatprep.subr.bf16.mxu0 %v1043
    %1334 = vmatpush1.bf16.msra.mxu0 %v1042
    %1335 = vmatprep.subr.bf16.mxu0 %v1047
    %1336 = vmatpush1.bf16.msra.mxu0 %v1046
    %1337 = vmatprep.subr.bf16.mxu0 %v1051
    %1338 = vmatpush1.bf16.msra.mxu0 %v1050
    %1339 = vmatprep.subr.bf16.mxu0 %v1055
    %1340 = vmatpush1.bf16.msra.mxu0 %v1054
    %1341 = vmatprep.subr.bf16.mxu0 %v1059
    %1342 = vmatpush1.bf16.msra.mxu0 %v1058
    %1343 = vmatprep.mubr.bf16.mxu0 %v419
    %1344 = vmatmul.mubr.bf16.gmra.mrb[0].mxu0 %v418
    %v1345 = vpop.f32.mrb[0].mxu0
    %v1346 = vadd.f32 %v1305, %v1345
    %v1347 = vpop.f32.mrb[0].mxu0
    %v1348 = vadd.f32 %v1307, %v1347
    %v1349 = vpop.f32.mrb[0].mxu0
    %v1350 = vpop.f32.mrb[0].mxu0
    %1351 = vdwg.mxu0
    %v1352 = vld [vmem:[%s6] sm:$0xf]
    %v1353 = vld [vmem:[%s7] sm:$0xf]
    %v1354 = vrot.slane %v1264, 4
    %v1355 = vadd.f32 %v1264, %v1354
    %v1356 = vrot.slane %v1355, 2
    %v1357 = vadd.f32 %v1355, %v1356
    %v1358 = vrot.slane %v1357, 1
    %v1359 = vadd.f32 %v1357, %v1358
    %v1360 = vrot.slane %v1266, 4
    %v1361 = vadd.f32 %v1266, %v1360
    %v1362 = vrot.slane %v1361, 2
    %v1363 = vadd.f32 %v1361, %v1362
    %v1364 = vrot.slane %v1363, 1
    %v1365 = vadd.f32 %v1363, %v1364
    %v1366 = vrot.slane %v1346, 4
    %v1367 = vadd.f32 %v1346, %v1366
    %v1368 = vrot.slane %v1367, 2
    %v1369 = vadd.f32 %v1367, %v1368
    %v1370 = vrot.slane %v1369, 1
    %v1371 = vadd.f32 %v1369, %v1370
    %v1372 = vrot.slane %v1348, 4
    %v1373 = vadd.f32 %v1348, %v1372
    %v1374 = vrot.slane %v1373, 2
    %v1375 = vadd.f32 %v1373, %v1374
    %v1376 = vrot.slane %v1375, 1
    %v1377 = vadd.f32 %v1375, %v1376
    %v1378 = vmul.f32 %v1264, %v1264
    %v1379 = vmul.f32 %v1266, %v1266
    %v1380 = vmul.f32 %v1346, %v1346
    %v1381 = vmul.f32 %v1348, %v1348
    %v1382 = vrot.slane %v1378, 4
    %v1383 = vadd.f32 %v1378, %v1382
    %v1384 = vrot.slane %v1383, 2
    %v1385 = vadd.f32 %v1383, %v1384
    %v1386 = vrot.slane %v1385, 1
    %v1387 = vadd.f32 %v1385, %v1386
    %v1388 = vrot.slane %v1379, 4
    %v1389 = vadd.f32 %v1379, %v1388
    %v1390 = vrot.slane %v1389, 2
    %v1391 = vadd.f32 %v1389, %v1390
    %v1392 = vrot.slane %v1391, 1
    %v1393 = vadd.f32 %v1391, %v1392
    %v1394 = vrot.slane %v1380, 4
    %v1395 = vadd.f32 %v1380, %v1394
    %v1396 = vrot.slane %v1395, 2
    %v1397 = vadd.f32 %v1395, %v1396
    %v1398 = vrot.slane %v1397, 1
    %v1399 = vadd.f32 %v1397, %v1398
    %v1400 = vrot.slane %v1381, 4
    %v1401 = vadd.f32 %v1381, %v1400
    %v1402 = vrot.slane %v1401, 2
    %v1403 = vadd.f32 %v1401, %v1402
    %v1404 = vrot.slane %v1403, 1
    %v1405 = vadd.f32 %v1403, %v1404
    %v1406 = vmul.f32 %v1359, 0.5
    %v1407 = vmul.f32 %v1365, 0.5
    %v1408 = vmul.f32 %v1371, 0.5
    %v1409 = vmul.f32 %v1377, 0.5
    %v1410 = vmul.f32 %v1387, 0.5
    %v1411 = vmul.f32 %v1393, 0.5
    %v1412 = vmul.f32 %v1399, 0.5
    %v1413 = vmul.f32 %v1405, 0.5
    %v1414 = vmul.f32 %v1406, %v1406
    %v1415 = vmul.f32 %v1407, %v1407
    %v1416 = vmul.f32 %v1408, %v1408
    %v1417 = vmul.f32 %v1409, %v1409
    %v1418 = vsub.f32 %v1410, %v1414
    %v1419 = vsub.f32 %v1411, %v1415
    %v1420 = vsub.f32 %v1412, %v1416
    %v1421 = vsub.f32 %v1413, %v1417
    %v1422 = vadd.f32 %v1418, 1e-05
    %v1423 = vadd.f32 %v1419, 1e-05
    %v1424 = vadd.f32 %v1420, 1e-05
    %v1425 = vadd.f32 %v1421, 1e-05
    %v1426 = vrsqrt.pop %v1422
    %v1427 = vrsqrt.pop %v1423
    %v1428 = vrsqrt.pop %v1424
    %v1429 = vrsqrt.pop %v1425
    %v1434 = vcombine.low %v1426, %v1427
    %v1435 = vcombine.low %v1428, %v1429
    %v1437 = vunpack.c.l.s4 1966171168
    %v1438 = vunpack.c.0.s8 %v1437
    %v1439 = vlaneseq
    %v1440 = vshrl.u32 %v1439, 7
    %v1441 = vsub.s32 %v1438, %v1440
    %v1442 = vrot.slane %v1434, %v1441
    %v1444 = vunpack.c.l.s4 1966171168
    %v1445 = vunpack.c.0.s8 %v1444
    %v1446 = vlaneseq
    %v1447 = vshrl.u32 %v1446, 7
    %v1448 = vsub.s32 %v1445, %v1447
    %v1449 = vrot.slane %v1435, %v1448
    %v1450 = vcombine.low %v1442, %v1449
    %v1452 = vunpack.c.l.s4 1966171168
    %v1453 = vunpack.c.0.s8 %v1452
    %v1454 = vlaneseq
    %v1455 = vshrl.u32 %v1454, 7
    %v1456 = vsub.s32 %v1453, %v1455
    %v1457 = vrot.slane %v1450, %v1456
    %v1459 = vmul.f32 %v1352, %v1457
    %v1461 = vlaneseq
    %v1462 = vshrl.u32 %v1461, 7
    %v1463 = vsub.s32 0, %v1462
    %v1464 = vrot.slane %v1459, %v1463
    %v1465 = vlaneseq
    %v1466 = vshrl.u32 %v1465, 7
    %v1467 = vsub.s32 1, %v1466
    %v1468 = vrot.slane %v1459, %v1467
    %v1469 = vlaneseq
    %v1470 = vshrl.u32 %v1469, 7
    %v1471 = vsub.s32 2, %v1470
    %v1472 = vrot.slane %v1459, %v1471
    %v1473 = vlaneseq
    %v1474 = vshrl.u32 %v1473, 7
    %v1475 = vsub.s32 3, %v1474
    %v1476 = vrot.slane %v1459, %v1475
    %v1481 = vmul.f32 %v1406, %v1464
    %v1482 = vmul.f32 %v1407, %v1468
    %v1483 = vmul.f32 %v1408, %v1472
    %v1484 = vmul.f32 %v1409, %v1476
    %v1489 = vcombine.low %v1481, %v1482
    %v1490 = vcombine.low %v1483, %v1484
    %v1492 = vunpack.c.l.s4 1966171168
    %v1493 = vunpack.c.0.s8 %v1492
    %v1494 = vlaneseq
    %v1495 = vshrl.u32 %v1494, 7
    %v1496 = vsub.s32 %v1493, %v1495
    %v1497 = vrot.slane %v1489, %v1496
    %v1499 = vunpack.c.l.s4 1966171168
    %v1500 = vunpack.c.0.s8 %v1499
    %v1501 = vlaneseq
    %v1502 = vshrl.u32 %v1501, 7
    %v1503 = vsub.s32 %v1500, %v1502
    %v1504 = vrot.slane %v1490, %v1503
    %v1505 = vcombine.low %v1497, %v1504
    %v1507 = vunpack.c.l.s4 1966171168
    %v1508 = vunpack.c.0.s8 %v1507
    %v1509 = vlaneseq
    %v1510 = vshrl.u32 %v1509, 7
    %v1511 = vsub.s32 %v1508, %v1510
    %v1512 = vrot.slane %v1505, %v1511
    %v1514 = vsub.f32 %v1353, %v1512
    %v1515 = vmul.f32 %v1264, %v1464
    %v1516 = vmul.f32 %v1266, %v1468
    %v1517 = vmul.f32 %v1346, %v1472
    %v1518 = vmul.f32 %v1348, %v1476
    %v1520 = vlaneseq
    %v1521 = vshrl.u32 %v1520, 7
    %v1522 = vsub.s32 0, %v1521
    %v1523 = vrot.slane %v1514, %v1522
    %v1524 = vlaneseq
    %v1525 = vshrl.u32 %v1524, 7
    %v1526 = vsub.s32 1, %v1525
    %v1527 = vrot.slane %v1514, %v1526
    %v1528 = vlaneseq
    %v1529 = vshrl.u32 %v1528, 7
    %v1530 = vsub.s32 2, %v1529
    %v1531 = vrot.slane %v1514, %v1530
    %v1532 = vlaneseq
    %v1533 = vshrl.u32 %v1532, 7
    %v1534 = vsub.s32 3, %v1533
    %v1535 = vrot.slane %v1514, %v1534
    %v1540 = vadd.f32 %v1515, %v1523
    %v1541 = vadd.f32 %v1516, %v1527
    %v1542 = vadd.f32 %v1517, %v1531
    %v1543 = vadd.f32 %v1518, %v1535
    %v1544 = vmul.f32 %v1540, 0.01
    %v1545 = vmul.f32 %v1541, 0.01
    %v1546 = vmul.f32 %v1542, 0.01
    %v1547 = vmul.f32 %v1543, 0.01
    %v1548 = vmax.f32 %v1540, %v1544
    %v1549 = vmax.f32 %v1541, %v1545
    %v1550 = vmax.f32 %v1542, %v1546
    %v1551 = vmax.f32 %v1543, %v1547
    %v1552 = vmul.f32 %v1548, %v410
    %v1553 = vmul.f32 %v1549, %v410
    %v1554 = vmul.f32 %v1550, %v410
    %v1555 = vmul.f32 %v1551, %v410
    %v1556 = vpack.c.bf16 %v1552, %v1552
    %v1557 = vpack.c.bf16 %v1553, %v1553
    %v1558 = vpack.c.bf16 %v1554, %v1554
    %v1559 = vpack.c.bf16 %v1555, %v1555
    %v1560 = vld [vmem:[#allocation5] sm:$0xff]
    %v1561 = vld [vmem:[#allocation5 + $0x8] sm:$0xff]
    %v1562 = vld [vmem:[#allocation5 + $0x10] sm:$0xff]
    %v1563 = vld [vmem:[#allocation5 + $0x18] sm:$0xff]
    %v1564 = vld [vmem:[#allocation5 + $0x20] sm:$0xff]
    %v1565 = vld [vmem:[#allocation5 + $0x28] sm:$0xff]
    %v1566 = vld [vmem:[#allocation5 + $0x30] sm:$0xff]
    %v1567 = vld [vmem:[#allocation5 + $0x38] sm:$0xff]
    %v1568 = vld [vmem:[#allocation5 + $0x40] sm:$0xff]
    %v1569 = vld [vmem:[#allocation5 + $0x48] sm:$0xff]
    %v1570 = vld [vmem:[#allocation5 + $0x50] sm:$0xff]
    %v1571 = vld [vmem:[#allocation5 + $0x58] sm:$0xff]
    %v1572 = vld [vmem:[#allocation5 + $0x60] sm:$0xff]
    %v1573 = vld [vmem:[#allocation5 + $0x68] sm:$0xff]
    %v1574 = vld [vmem:[#allocation5 + $0x70] sm:$0xff]
    %v1575 = vld [vmem:[#allocation5 + $0x78] sm:$0xff]
    %v1576 = vld [vmem:[#allocation5 + $0x80] sm:$0xff]
    %v1577 = vld [vmem:[#allocation5 + $0x88] sm:$0xff]
    %v1578 = vld [vmem:[#allocation5 + $0x90] sm:$0xff]
    %v1579 = vld [vmem:[#allocation5 + $0x98] sm:$0xff]
    %v1580 = vld [vmem:[#allocation5 + $0xa0] sm:$0xff]
    %v1581 = vld [vmem:[#allocation5 + $0xa8] sm:$0xff]
    %v1582 = vld [vmem:[#allocation5 + $0xb0] sm:$0xff]
    %v1583 = vld [vmem:[#allocation5 + $0xb8] sm:$0xff]
    %v1584 = vld [vmem:[#allocation5 + $0xc0] sm:$0xff]
    %v1585 = vld [vmem:[#allocation5 + $0xc8] sm:$0xff]
    %v1586 = vld [vmem:[#allocation5 + $0xd0] sm:$0xff]
    %v1587 = vld [vmem:[#allocation5 + $0xd8] sm:$0xff]
    %v1588 = vld [vmem:[#allocation5 + $0xe0] sm:$0xff]
    %v1589 = vld [vmem:[#allocation5 + $0xe8] sm:$0xff]
    %v1590 = vld [vmem:[#allocation5 + $0xf0] sm:$0xff]
    %v1591 = vld [vmem:[#allocation5 + $0xf8] sm:$0xff]
    %v1592 = vld [vmem:[#allocation5 + $0x100] sm:$0xff]
    %v1593 = vld [vmem:[#allocation5 + $0x108] sm:$0xff]
    %v1594 = vld [vmem:[#allocation5 + $0x110] sm:$0xff]
    %v1595 = vld [vmem:[#allocation5 + $0x118] sm:$0xff]
    %v1596 = vld [vmem:[#allocation5 + $0x120] sm:$0xff]
    %v1597 = vld [vmem:[#allocation5 + $0x128] sm:$0xff]
    %v1598 = vld [vmem:[#allocation5 + $0x130] sm:$0xff]
    %v1599 = vld [vmem:[#allocation5 + $0x138] sm:$0xff]
    %v1600 = vld [vmem:[#allocation5 + $0x140] sm:$0xff]
    %v1601 = vld [vmem:[#allocation5 + $0x148] sm:$0xff]
    %v1602 = vld [vmem:[#allocation5 + $0x150] sm:$0xff]
    %v1603 = vld [vmem:[#allocation5 + $0x158] sm:$0xff]
    %v1604 = vld [vmem:[#allocation5 + $0x160] sm:$0xff]
    %v1605 = vld [vmem:[#allocation5 + $0x168] sm:$0xff]
    %v1606 = vld [vmem:[#allocation5 + $0x170] sm:$0xff]
    %v1607 = vld [vmem:[#allocation5 + $0x178] sm:$0xff]
    %v1608 = vld [vmem:[#allocation5 + $0x180] sm:$0xff]
    %v1609 = vld [vmem:[#allocation5 + $0x188] sm:$0xff]
    %v1610 = vld [vmem:[#allocation5 + $0x190] sm:$0xff]
    %v1611 = vld [vmem:[#allocation5 + $0x198] sm:$0xff]
    %v1612 = vld [vmem:[#allocation5 + $0x1a0] sm:$0xff]
    %v1613 = vld [vmem:[#allocation5 + $0x1a8] sm:$0xff]
    %v1614 = vld [vmem:[#allocation5 + $0x1b0] sm:$0xff]
    %v1615 = vld [vmem:[#allocation5 + $0x1b8] sm:$0xff]
    %v1616 = vld [vmem:[#allocation5 + $0x1c0] sm:$0xff]
    %v1617 = vld [vmem:[#allocation5 + $0x1c8] sm:$0xff]
    %v1618 = vld [vmem:[#allocation5 + $0x1d0] sm:$0xff]
    %v1619 = vld [vmem:[#allocation5 + $0x1d8] sm:$0xff]
    %v1620 = vld [vmem:[#allocation5 + $0x1e0] sm:$0xff]
    %v1621 = vld [vmem:[#allocation5 + $0x1e8] sm:$0xff]
    %v1622 = vld [vmem:[#allocation5 + $0x1f0] sm:$0xff]
    %v1623 = vld [vmem:[#allocation5 + $0x1f8] sm:$0xff]
    %v1624 = vld [vmem:[#allocation5 + $0x200] sm:$0xff]
    %v1625 = vld [vmem:[#allocation5 + $0x208] sm:$0xff]
    %v1626 = vld [vmem:[#allocation5 + $0x210] sm:$0xff]
    %v1627 = vld [vmem:[#allocation5 + $0x218] sm:$0xff]
    %v1628 = vld [vmem:[#allocation5 + $0x220] sm:$0xff]
    %v1629 = vld [vmem:[#allocation5 + $0x228] sm:$0xff]
    %v1630 = vld [vmem:[#allocation5 + $0x230] sm:$0xff]
    %v1631 = vld [vmem:[#allocation5 + $0x238] sm:$0xff]
    %v1632 = vld [vmem:[#allocation5 + $0x240] sm:$0xff]
    %v1633 = vld [vmem:[#allocation5 + $0x248] sm:$0xff]
    %v1634 = vld [vmem:[#allocation5 + $0x250] sm:$0xff]
    %v1635 = vld [vmem:[#allocation5 + $0x258] sm:$0xff]
    %v1636 = vld [vmem:[#allocation5 + $0x260] sm:$0xff]
    %v1637 = vld [vmem:[#allocation5 + $0x268] sm:$0xff]
    %v1638 = vld [vmem:[#allocation5 + $0x270] sm:$0xff]
    %v1639 = vld [vmem:[#allocation5 + $0x278] sm:$0xff]
    %v1640 = vld [vmem:[#allocation5 + $0x280] sm:$0xff]
    %v1641 = vld [vmem:[#allocation5 + $0x288] sm:$0xff]
    %v1642 = vld [vmem:[#allocation5 + $0x290] sm:$0xff]
    %v1643 = vld [vmem:[#allocation5 + $0x298] sm:$0xff]
    %v1644 = vld [vmem:[#allocation5 + $0x2a0] sm:$0xff]
    %v1645 = vld [vmem:[#allocation5 + $0x2a8] sm:$0xff]
    %v1646 = vld [vmem:[#allocation5 + $0x2b0] sm:$0xff]
    %v1647 = vld [vmem:[#allocation5 + $0x2b8] sm:$0xff]
    %v1648 = vld [vmem:[#allocation5 + $0x2c0] sm:$0xff]
    %v1649 = vld [vmem:[#allocation5 + $0x2c8] sm:$0xff]
    %v1650 = vld [vmem:[#allocation5 + $0x2d0] sm:$0xff]
    %v1651 = vld [vmem:[#allocation5 + $0x2d8] sm:$0xff]
    %v1652 = vld [vmem:[#allocation5 + $0x2e0] sm:$0xff]
    %v1653 = vld [vmem:[#allocation5 + $0x2e8] sm:$0xff]
    %v1654 = vld [vmem:[#allocation5 + $0x2f0] sm:$0xff]
    %v1655 = vld [vmem:[#allocation5 + $0x2f8] sm:$0xff]
    %v1656 = vld [vmem:[#allocation5 + $0x300] sm:$0xff]
    %v1657 = vld [vmem:[#allocation5 + $0x308] sm:$0xff]
    %v1658 = vld [vmem:[#allocation5 + $0x310] sm:$0xff]
    %v1659 = vld [vmem:[#allocation5 + $0x318] sm:$0xff]
    %v1660 = vld [vmem:[#allocation5 + $0x320] sm:$0xff]
    %v1661 = vld [vmem:[#allocation5 + $0x328] sm:$0xff]
    %v1662 = vld [vmem:[#allocation5 + $0x330] sm:$0xff]
    %v1663 = vld [vmem:[#allocation5 + $0x338] sm:$0xff]
    %v1664 = vld [vmem:[#allocation5 + $0x340] sm:$0xff]
    %v1665 = vld [vmem:[#allocation5 + $0x348] sm:$0xff]
    %v1666 = vld [vmem:[#allocation5 + $0x350] sm:$0xff]
    %v1667 = vld [vmem:[#allocation5 + $0x358] sm:$0xff]
    %v1668 = vld [vmem:[#allocation5 + $0x360] sm:$0xff]
    %v1669 = vld [vmem:[#allocation5 + $0x368] sm:$0xff]
    %v1670 = vld [vmem:[#allocation5 + $0x370] sm:$0xff]
    %v1671 = vld [vmem:[#allocation5 + $0x378] sm:$0xff]
    %v1672 = vld [vmem:[#allocation5 + $0x380] sm:$0xff]
    %v1673 = vld [vmem:[#allocation5 + $0x388] sm:$0xff]
    %v1674 = vld [vmem:[#allocation5 + $0x390] sm:$0xff]
    %v1675 = vld [vmem:[#allocation5 + $0x398] sm:$0xff]
    %v1676 = vld [vmem:[#allocation5 + $0x3a0] sm:$0xff]
    %v1677 = vld [vmem:[#allocation5 + $0x3a8] sm:$0xff]
    %v1678 = vld [vmem:[#allocation5 + $0x3b0] sm:$0xff]
    %v1679 = vld [vmem:[#allocation5 + $0x3b8] sm:$0xff]
    %v1680 = vld [vmem:[#allocation5 + $0x3c0] sm:$0xff]
    %v1681 = vld [vmem:[#allocation5 + $0x3c8] sm:$0xff]
    %v1682 = vld [vmem:[#allocation5 + $0x3d0] sm:$0xff]
    %v1683 = vld [vmem:[#allocation5 + $0x3d8] sm:$0xff]
    %v1684 = vld [vmem:[#allocation5 + $0x3e0] sm:$0xff]
    %v1685 = vld [vmem:[#allocation5 + $0x3e8] sm:$0xff]
    %v1686 = vld [vmem:[#allocation5 + $0x3f0] sm:$0xff]
    %v1687 = vld [vmem:[#allocation5 + $0x3f8] sm:$0xff]
    %v1816 = vunpack.c.l.b16 %v1560
    %v1817 = vunpack.c.h.b16 %v1560
    %v1818 = vunpack.c.l.b16 %v1561
    %v1819 = vunpack.c.h.b16 %v1561
    %v1820 = vunpack.c.l.b16 %v1562
    %v1821 = vunpack.c.h.b16 %v1562
    %v1822 = vunpack.c.l.b16 %v1563
    %v1823 = vunpack.c.h.b16 %v1563
    %v1824 = vunpack.c.l.b16 %v1564
    %v1825 = vunpack.c.h.b16 %v1564
    %v1826 = vunpack.c.l.b16 %v1565
    %v1827 = vunpack.c.h.b16 %v1565
    %v1828 = vunpack.c.l.b16 %v1566
    %v1829 = vunpack.c.h.b16 %v1566
    %v1830 = vunpack.c.l.b16 %v1567
    %v1831 = vunpack.c.h.b16 %v1567
    %v1832 = vunpack.c.l.b16 %v1568
    %v1833 = vunpack.c.h.b16 %v1568
    %v1834 = vunpack.c.l.b16 %v1569
    %v1835 = vunpack.c.h.b16 %v1569
    %v1836 = vunpack.c.l.b16 %v1570
    %v1837 = vunpack.c.h.b16 %v1570
    %v1838 = vunpack.c.l.b16 %v1571
    %v1839 = vunpack.c.h.b16 %v1571
    %v1840 = vunpack.c.l.b16 %v1572
    %v1841 = vunpack.c.h.b16 %v1572
    %v1842 = vunpack.c.l.b16 %v1573
    %v1843 = vunpack.c.h.b16 %v1573
    %v1844 = vunpack.c.l.b16 %v1574
    %v1845 = vunpack.c.h.b16 %v1574
    %v1846 = vunpack.c.l.b16 %v1575
    %v1847 = vunpack.c.h.b16 %v1575
    %v1848 = vunpack.c.l.b16 %v1576
    %v1849 = vunpack.c.h.b16 %v1576
    %v1850 = vunpack.c.l.b16 %v1577
    %v1851 = vunpack.c.h.b16 %v1577
    %v1852 = vunpack.c.l.b16 %v1578
    %v1853 = vunpack.c.h.b16 %v1578
    %v1854 = vunpack.c.l.b16 %v1579
    %v1855 = vunpack.c.h.b16 %v1579
    %v1856 = vunpack.c.l.b16 %v1580
    %v1857 = vunpack.c.h.b16 %v1580
    %v1858 = vunpack.c.l.b16 %v1581
    %v1859 = vunpack.c.h.b16 %v1581
    %v1860 = vunpack.c.l.b16 %v1582
    %v1861 = vunpack.c.h.b16 %v1582
    %v1862 = vunpack.c.l.b16 %v1583
    %v1863 = vunpack.c.h.b16 %v1583
    %v1864 = vunpack.c.l.b16 %v1584
    %v1865 = vunpack.c.h.b16 %v1584
    %v1866 = vunpack.c.l.b16 %v1585
    %v1867 = vunpack.c.h.b16 %v1585
    %v1868 = vunpack.c.l.b16 %v1586
    %v1869 = vunpack.c.h.b16 %v1586
    %v1870 = vunpack.c.l.b16 %v1587
    %v1871 = vunpack.c.h.b16 %v1587
    %v1872 = vunpack.c.l.b16 %v1588
    %v1873 = vunpack.c.h.b16 %v1588
    %v1874 = vunpack.c.l.b16 %v1589
    %v1875 = vunpack.c.h.b16 %v1589
    %v1876 = vunpack.c.l.b16 %v1590
    %v1877 = vunpack.c.h.b16 %v1590
    %v1878 = vunpack.c.l.b16 %v1591
    %v1879 = vunpack.c.h.b16 %v1591
    %v1880 = vunpack.c.l.b16 %v1592
    %v1881 = vunpack.c.h.b16 %v1592
    %v1882 = vunpack.c.l.b16 %v1593
    %v1883 = vunpack.c.h.b16 %v1593
    %v1884 = vunpack.c.l.b16 %v1594
    %v1885 = vunpack.c.h.b16 %v1594
    %v1886 = vunpack.c.l.b16 %v1595
    %v1887 = vunpack.c.h.b16 %v1595
    %v1888 = vunpack.c.l.b16 %v1596
    %v1889 = vunpack.c.h.b16 %v1596
    %v1890 = vunpack.c.l.b16 %v1597
    %v1891 = vunpack.c.h.b16 %v1597
    %v1892 = vunpack.c.l.b16 %v1598
    %v1893 = vunpack.c.h.b16 %v1598
    %v1894 = vunpack.c.l.b16 %v1599
    %v1895 = vunpack.c.h.b16 %v1599
    %v1896 = vunpack.c.l.b16 %v1600
    %v1897 = vunpack.c.h.b16 %v1600
    %v1898 = vunpack.c.l.b16 %v1601
    %v1899 = vunpack.c.h.b16 %v1601
    %v1900 = vunpack.c.l.b16 %v1602
    %v1901 = vunpack.c.h.b16 %v1602
    %v1902 = vunpack.c.l.b16 %v1603
    %v1903 = vunpack.c.h.b16 %v1603
    %v1904 = vunpack.c.l.b16 %v1604
    %v1905 = vunpack.c.h.b16 %v1604
    %v1906 = vunpack.c.l.b16 %v1605
    %v1907 = vunpack.c.h.b16 %v1605
    %v1908 = vunpack.c.l.b16 %v1606
    %v1909 = vunpack.c.h.b16 %v1606
    %v1910 = vunpack.c.l.b16 %v1607
    %v1911 = vunpack.c.h.b16 %v1607
    %v1912 = vunpack.c.l.b16 %v1608
    %v1913 = vunpack.c.h.b16 %v1608
    %v1914 = vunpack.c.l.b16 %v1609
    %v1915 = vunpack.c.h.b16 %v1609
    %v1916 = vunpack.c.l.b16 %v1610
    %v1917 = vunpack.c.h.b16 %v1610
    %v1918 = vunpack.c.l.b16 %v1611
    %v1919 = vunpack.c.h.b16 %v1611
    %v1920 = vunpack.c.l.b16 %v1612
    %v1921 = vunpack.c.h.b16 %v1612
    %v1922 = vunpack.c.l.b16 %v1613
    %v1923 = vunpack.c.h.b16 %v1613
    %v1924 = vunpack.c.l.b16 %v1614
    %v1925 = vunpack.c.h.b16 %v1614
    %v1926 = vunpack.c.l.b16 %v1615
    %v1927 = vunpack.c.h.b16 %v1615
    %v1928 = vunpack.c.l.b16 %v1616
    %v1929 = vunpack.c.h.b16 %v1616
    %v1930 = vunpack.c.l.b16 %v1617
    %v1931 = vunpack.c.h.b16 %v1617
    %v1932 = vunpack.c.l.b16 %v1618
    %v1933 = vunpack.c.h.b16 %v1618
    %v1934 = vunpack.c.l.b16 %v1619
    %v1935 = vunpack.c.h.b16 %v1619
    %v1936 = vunpack.c.l.b16 %v1620
    %v1937 = vunpack.c.h.b16 %v1620
    %v1938 = vunpack.c.l.b16 %v1621
    %v1939 = vunpack.c.h.b16 %v1621
    %v1940 = vunpack.c.l.b16 %v1622
    %v1941 = vunpack.c.h.b16 %v1622
    %v1942 = vunpack.c.l.b16 %v1623
    %v1943 = vunpack.c.h.b16 %v1623
    %v1944 = vunpack.c.l.b16 %v1624
    %v1945 = vunpack.c.h.b16 %v1624
    %v1946 = vunpack.c.l.b16 %v1625
    %v1947 = vunpack.c.h.b16 %v1625
    %v1948 = vunpack.c.l.b16 %v1626
    %v1949 = vunpack.c.h.b16 %v1626
    %v1950 = vunpack.c.l.b16 %v1627
    %v1951 = vunpack.c.h.b16 %v1627
    %v1952 = vunpack.c.l.b16 %v1628
    %v1953 = vunpack.c.h.b16 %v1628
    %v1954 = vunpack.c.l.b16 %v1629
    %v1955 = vunpack.c.h.b16 %v1629
    %v1956 = vunpack.c.l.b16 %v1630
    %v1957 = vunpack.c.h.b16 %v1630
    %v1958 = vunpack.c.l.b16 %v1631
    %v1959 = vunpack.c.h.b16 %v1631
    %v1960 = vunpack.c.l.b16 %v1632
    %v1961 = vunpack.c.h.b16 %v1632
    %v1962 = vunpack.c.l.b16 %v1633
    %v1963 = vunpack.c.h.b16 %v1633
    %v1964 = vunpack.c.l.b16 %v1634
    %v1965 = vunpack.c.h.b16 %v1634
    %v1966 = vunpack.c.l.b16 %v1635
    %v1967 = vunpack.c.h.b16 %v1635
    %v1968 = vunpack.c.l.b16 %v1636
    %v1969 = vunpack.c.h.b16 %v1636
    %v1970 = vunpack.c.l.b16 %v1637
    %v1971 = vunpack.c.h.b16 %v1637
    %v1972 = vunpack.c.l.b16 %v1638
    %v1973 = vunpack.c.h.b16 %v1638
    %v1974 = vunpack.c.l.b16 %v1639
    %v1975 = vunpack.c.h.b16 %v1639
    %v1976 = vunpack.c.l.b16 %v1640
    %v1977 = vunpack.c.h.b16 %v1640
    %v1978 = vunpack.c.l.b16 %v1641
    %v1979 = vunpack.c.h.b16 %v1641
    %v1980 = vunpack.c.l.b16 %v1642
    %v1981 = vunpack.c.h.b16 %v1642
    %v1982 = vunpack.c.l.b16 %v1643
    %v1983 = vunpack.c.h.b16 %v1643
    %v1984 = vunpack.c.l.b16 %v1644
    %v1985 = vunpack.c.h.b16 %v1644
    %v1986 = vunpack.c.l.b16 %v1645
    %v1987 = vunpack.c.h.b16 %v1645
    %v1988 = vunpack.c.l.b16 %v1646
    %v1989 = vunpack.c.h.b16 %v1646
    %v1990 = vunpack.c.l.b16 %v1647
    %v1991 = vunpack.c.h.b16 %v1647
    %v1992 = vunpack.c.l.b16 %v1648
    %v1993 = vunpack.c.h.b16 %v1648
    %v1994 = vunpack.c.l.b16 %v1649
    %v1995 = vunpack.c.h.b16 %v1649
    %v1996 = vunpack.c.l.b16 %v1650
    %v1997 = vunpack.c.h.b16 %v1650
    %v1998 = vunpack.c.l.b16 %v1651
    %v1999 = vunpack.c.h.b16 %v1651
    %v2000 = vunpack.c.l.b16 %v1652
    %v2001 = vunpack.c.h.b16 %v1652
    %v2002 = vunpack.c.l.b16 %v1653
    %v2003 = vunpack.c.h.b16 %v1653
    %v2004 = vunpack.c.l.b16 %v1654
    %v2005 = vunpack.c.h.b16 %v1654
    %v2006 = vunpack.c.l.b16 %v1655
    %v2007 = vunpack.c.h.b16 %v1655
    %v2008 = vunpack.c.l.b16 %v1656
    %v2009 = vunpack.c.h.b16 %v1656
    %v2010 = vunpack.c.l.b16 %v1657
    %v2011 = vunpack.c.h.b16 %v1657
    %v2012 = vunpack.c.l.b16 %v1658
    %v2013 = vunpack.c.h.b16 %v1658
    %v2014 = vunpack.c.l.b16 %v1659
    %v2015 = vunpack.c.h.b16 %v1659
    %v2016 = vunpack.c.l.b16 %v1660
    %v2017 = vunpack.c.h.b16 %v1660
    %v2018 = vunpack.c.l.b16 %v1661
    %v2019 = vunpack.c.h.b16 %v1661
    %v2020 = vunpack.c.l.b16 %v1662
    %v2021 = vunpack.c.h.b16 %v1662
    %v2022 = vunpack.c.l.b16 %v1663
    %v2023 = vunpack.c.h.b16 %v1663
    %v2024 = vunpack.c.l.b16 %v1664
    %v2025 = vunpack.c.h.b16 %v1664
    %v2026 = vunpack.c.l.b16 %v1665
    %v2027 = vunpack.c.h.b16 %v1665
    %v2028 = vunpack.c.l.b16 %v1666
    %v2029 = vunpack.c.h.b16 %v1666
    %v2030 = vunpack.c.l.b16 %v1667
    %v2031 = vunpack.c.h.b16 %v1667
    %v2032 = vunpack.c.l.b16 %v1668
    %v2033 = vunpack.c.h.b16 %v1668
    %v2034 = vunpack.c.l.b16 %v1669
    %v2035 = vunpack.c.h.b16 %v1669
    %v2036 = vunpack.c.l.b16 %v1670
    %v2037 = vunpack.c.h.b16 %v1670
    %v2038 = vunpack.c.l.b16 %v1671
    %v2039 = vunpack.c.h.b16 %v1671
    %v2040 = vunpack.c.l.b16 %v1672
    %v2041 = vunpack.c.h.b16 %v1672
    %v2042 = vunpack.c.l.b16 %v1673
    %v2043 = vunpack.c.h.b16 %v1673
    %v2044 = vunpack.c.l.b16 %v1674
    %v2045 = vunpack.c.h.b16 %v1674
    %v2046 = vunpack.c.l.b16 %v1675
    %v2047 = vunpack.c.h.b16 %v1675
    %v2048 = vunpack.c.l.b16 %v1676
    %v2049 = vunpack.c.h.b16 %v1676
    %v2050 = vunpack.c.l.b16 %v1677
    %v2051 = vunpack.c.h.b16 %v1677
    %v2052 = vunpack.c.l.b16 %v1678
    %v2053 = vunpack.c.h.b16 %v1678
    %v2054 = vunpack.c.l.b16 %v1679
    %v2055 = vunpack.c.h.b16 %v1679
    %v2056 = vunpack.c.l.b16 %v1680
    %v2057 = vunpack.c.h.b16 %v1680
    %v2058 = vunpack.c.l.b16 %v1681
    %v2059 = vunpack.c.h.b16 %v1681
    %v2060 = vunpack.c.l.b16 %v1682
    %v2061 = vunpack.c.h.b16 %v1682
    %v2062 = vunpack.c.l.b16 %v1683
    %v2063 = vunpack.c.h.b16 %v1683
    %v2064 = vunpack.c.l.b16 %v1684
    %v2065 = vunpack.c.h.b16 %v1684
    %v2066 = vunpack.c.l.b16 %v1685
    %v2067 = vunpack.c.h.b16 %v1685
    %v2068 = vunpack.c.l.b16 %v1686
    %v2069 = vunpack.c.h.b16 %v1686
    %v2070 = vunpack.c.l.b16 %v1687
    %v2071 = vunpack.c.h.b16 %v1687
    %v2072 = vpack.c.b16 %v1820, %v1816
    %v2073 = vpack.c.b16 %v1821, %v1817
    %v2074 = vpack.c.b16 %v1822, %v1818
    %v2075 = vpack.c.b16 %v1823, %v1819
    %v2076 = vpack.c.b16 %v1828, %v1824
    %v2077 = vpack.c.b16 %v1829, %v1825
    %v2078 = vpack.c.b16 %v1830, %v1826
    %v2079 = vpack.c.b16 %v1831, %v1827
    %v2080 = vpack.c.b16 %v1836, %v1832
    %v2081 = vpack.c.b16 %v1837, %v1833
    %v2082 = vpack.c.b16 %v1838, %v1834
    %v2083 = vpack.c.b16 %v1839, %v1835
    %v2084 = vpack.c.b16 %v1844, %v1840
    %v2085 = vpack.c.b16 %v1845, %v1841
    %v2086 = vpack.c.b16 %v1846, %v1842
    %v2087 = vpack.c.b16 %v1847, %v1843
    %v2088 = vpack.c.b16 %v1852, %v1848
    %v2089 = vpack.c.b16 %v1853, %v1849
    %v2090 = vpack.c.b16 %v1854, %v1850
    %v2091 = vpack.c.b16 %v1855, %v1851
    %v2092 = vpack.c.b16 %v1860, %v1856
    %v2093 = vpack.c.b16 %v1861, %v1857
    %v2094 = vpack.c.b16 %v1862, %v1858
    %v2095 = vpack.c.b16 %v1863, %v1859
    %v2096 = vpack.c.b16 %v1868, %v1864
    %v2097 = vpack.c.b16 %v1869, %v1865
    %v2098 = vpack.c.b16 %v1870, %v1866
    %v2099 = vpack.c.b16 %v1871, %v1867
    %v2100 = vpack.c.b16 %v1876, %v1872
    %v2101 = vpack.c.b16 %v1877, %v1873
    %v2102 = vpack.c.b16 %v1878, %v1874
    %v2103 = vpack.c.b16 %v1879, %v1875
    %v2104 = vpack.c.b16 %v1884, %v1880
    %v2105 = vpack.c.b16 %v1885, %v1881
    %v2106 = vpack.c.b16 %v1886, %v1882
    %v2107 = vpack.c.b16 %v1887, %v1883
    %v2108 = vpack.c.b16 %v1892, %v1888
    %v2109 = vpack.c.b16 %v1893, %v1889
    %v2110 = vpack.c.b16 %v1894, %v1890
    %v2111 = vpack.c.b16 %v1895, %v1891
    %v2112 = vpack.c.b16 %v1900, %v1896
    %v2113 = vpack.c.b16 %v1901, %v1897
    %v2114 = vpack.c.b16 %v1902, %v1898
    %v2115 = vpack.c.b16 %v1903, %v1899
    %v2116 = vpack.c.b16 %v1908, %v1904
    %v2117 = vpack.c.b16 %v1909, %v1905
    %v2118 = vpack.c.b16 %v1910, %v1906
    %v2119 = vpack.c.b16 %v1911, %v1907
    %v2120 = vpack.c.b16 %v1916, %v1912
    %v2121 = vpack.c.b16 %v1917, %v1913
    %v2122 = vpack.c.b16 %v1918, %v1914
    %v2123 = vpack.c.b16 %v1919, %v1915
    %v2124 = vpack.c.b16 %v1924, %v1920
    %v2125 = vpack.c.b16 %v1925, %v1921
    %v2126 = vpack.c.b16 %v1926, %v1922
    %v2127 = vpack.c.b16 %v1927, %v1923
    %v2128 = vpack.c.b16 %v1932, %v1928
    %v2129 = vpack.c.b16 %v1933, %v1929
    %v2130 = vpack.c.b16 %v1934, %v1930
    %v2131 = vpack.c.b16 %v1935, %v1931
    %v2132 = vpack.c.b16 %v1940, %v1936
    %v2133 = vpack.c.b16 %v1941, %v1937
    %v2134 = vpack.c.b16 %v1942, %v1938
    %v2135 = vpack.c.b16 %v1943, %v1939
    %v2136 = vpack.c.b16 %v1948, %v1944
    %v2137 = vpack.c.b16 %v1949, %v1945
    %v2138 = vpack.c.b16 %v1950, %v1946
    %v2139 = vpack.c.b16 %v1951, %v1947
    %v2140 = vpack.c.b16 %v1956, %v1952
    %v2141 = vpack.c.b16 %v1957, %v1953
    %v2142 = vpack.c.b16 %v1958, %v1954
    %v2143 = vpack.c.b16 %v1959, %v1955
    %v2144 = vpack.c.b16 %v1964, %v1960
    %v2145 = vpack.c.b16 %v1965, %v1961
    %v2146 = vpack.c.b16 %v1966, %v1962
    %v2147 = vpack.c.b16 %v1967, %v1963
    %v2148 = vpack.c.b16 %v1972, %v1968
    %v2149 = vpack.c.b16 %v1973, %v1969
    %v2150 = vpack.c.b16 %v1974, %v1970
    %v2151 = vpack.c.b16 %v1975, %v1971
    %v2152 = vpack.c.b16 %v1980, %v1976
    %v2153 = vpack.c.b16 %v1981, %v1977
    %v2154 = vpack.c.b16 %v1982, %v1978
    %v2155 = vpack.c.b16 %v1983, %v1979
    %v2156 = vpack.c.b16 %v1988, %v1984
    %v2157 = vpack.c.b16 %v1989, %v1985
    %v2158 = vpack.c.b16 %v1990, %v1986
    %v2159 = vpack.c.b16 %v1991, %v1987
    %v2160 = vpack.c.b16 %v1996, %v1992
    %v2161 = vpack.c.b16 %v1997, %v1993
    %v2162 = vpack.c.b16 %v1998, %v1994
    %v2163 = vpack.c.b16 %v1999, %v1995
    %v2164 = vpack.c.b16 %v2004, %v2000
    %v2165 = vpack.c.b16 %v2005, %v2001
    %v2166 = vpack.c.b16 %v2006, %v2002
    %v2167 = vpack.c.b16 %v2007, %v2003
    %v2168 = vpack.c.b16 %v2012, %v2008
    %v2169 = vpack.c.b16 %v2013, %v2009
    %v2170 = vpack.c.b16 %v2014, %v2010
    %v2171 = vpack.c.b16 %v2015, %v2011
    %v2172 = vpack.c.b16 %v2020, %v2016
    %v2173 = vpack.c.b16 %v2021, %v2017
    %v2174 = vpack.c.b16 %v2022, %v2018
    %v2175 = vpack.c.b16 %v2023, %v2019
    %v2176 = vpack.c.b16 %v2028, %v2024
    %v2177 = vpack.c.b16 %v2029, %v2025
    %v2178 = vpack.c.b16 %v2030, %v2026
    %v2179 = vpack.c.b16 %v2031, %v2027
    %v2180 = vpack.c.b16 %v2036, %v2032
    %v2181 = vpack.c.b16 %v2037, %v2033
    %v2182 = vpack.c.b16 %v2038, %v2034
    %v2183 = vpack.c.b16 %v2039, %v2035
    %v2184 = vpack.c.b16 %v2044, %v2040
    %v2185 = vpack.c.b16 %v2045, %v2041
    %v2186 = vpack.c.b16 %v2046, %v2042
    %v2187 = vpack.c.b16 %v2047, %v2043
    %v2188 = vpack.c.b16 %v2052, %v2048
    %v2189 = vpack.c.b16 %v2053, %v2049
    %v2190 = vpack.c.b16 %v2054, %v2050
    %v2191 = vpack.c.b16 %v2055, %v2051
    %v2192 = vpack.c.b16 %v2060, %v2056
    %v2193 = vpack.c.b16 %v2061, %v2057
    %v2194 = vpack.c.b16 %v2062, %v2058
    %v2195 = vpack.c.b16 %v2063, %v2059
    %v2196 = vpack.c.b16 %v2068, %v2064
    %v2197 = vpack.c.b16 %v2069, %v2065
    %v2198 = vpack.c.b16 %v2070, %v2066
    %v2199 = vpack.c.b16 %v2071, %v2067
    %2328 = vmatprep.subr.bf16.mxu0 %v2073
    %2329 = vmatpush1.bf16.msra.mxu0 %v2072
    %2330 = vmatprep.subr.bf16.mxu0 %v2077
    %2331 = vmatpush1.bf16.msra.mxu0 %v2076
    %2332 = vmatprep.subr.bf16.mxu0 %v2081
    %2333 = vmatpush1.bf16.msra.mxu0 %v2080
    %2334 = vmatprep.subr.bf16.mxu0 %v2085
    %2335 = vmatpush1.bf16.msra.mxu0 %v2084
    %2336 = vmatprep.subr.bf16.mxu0 %v2089
    %2337 = vmatpush1.bf16.msra.mxu0 %v2088
    %2338 = vmatprep.subr.bf16.mxu0 %v2093
    %2339 = vmatpush1.bf16.msra.mxu0 %v2092
    %2340 = vmatprep.subr.bf16.mxu0 %v2097
    %2341 = vmatpush1.bf16.msra.mxu0 %v2096
    %2342 = vmatprep.subr.bf16.mxu0 %v2101
    %2343 = vmatpush1.bf16.msra.mxu0 %v2100
    %2344 = vmatprep.subr.bf16.mxu0 %v2105
    %2345 = vmatpush1.bf16.msra.mxu0 %v2104
    %2346 = vmatprep.subr.bf16.mxu0 %v2109
    %2347 = vmatpush1.bf16.msra.mxu0 %v2108
    %2348 = vmatprep.subr.bf16.mxu0 %v2113
    %2349 = vmatpush1.bf16.msra.mxu0 %v2112
    %2350 = vmatprep.subr.bf16.mxu0 %v2117
    %2351 = vmatpush1.bf16.msra.mxu0 %v2116
    %2352 = vmatprep.subr.bf16.mxu0 %v2121
    %2353 = vmatpush1.bf16.msra.mxu0 %v2120
    %2354 = vmatprep.subr.bf16.mxu0 %v2125
    %2355 = vmatpush1.bf16.msra.mxu0 %v2124
    %2356 = vmatprep.subr.bf16.mxu0 %v2129
    %2357 = vmatpush1.bf16.msra.mxu0 %v2128
    %2358 = vmatprep.subr.bf16.mxu0 %v2133
    %2359 = vmatpush1.bf16.msra.mxu0 %v2132
    %2360 = vmatprep.mubr.bf16.mxu0 %v1557
    %2361 = vmatmul.mubr.bf16.gmra.mrb[0].mxu0 %v1556
    %v2362 = vpop.f32.mrb[0].mxu0
    %v2363 = vadd.f32 0.0, %v2362
    %v2364 = vpop.f32.mrb[0].mxu0
    %v2365 = vadd.f32 0.0, %v2364
    %v2366 = vpop.f32.mrb[0].mxu0
    %v2367 = vpop.f32.mrb[0].mxu0
    %2368 = vdwg.mxu0
    %2369 = vmatprep.subr.bf16.mxu0 %v2137
    %2370 = vmatpush1.bf16.msra.mxu0 %v2136
    %2371 = vmatprep.subr.bf16.mxu0 %v2141
    %2372 = vmatpush1.bf16.msra.mxu0 %v2140
    %2373 = vmatprep.subr.bf16.mxu0 %v2145
    %2374 = vmatpush1.bf16.msra.mxu0 %v2144
    %2375 = vmatprep.subr.bf16.mxu0 %v2149
    %2376 = vmatpush1.bf16.msra.mxu0 %v2148
    %2377 = vmatprep.subr.bf16.mxu0 %v2153
    %2378 = vmatpush1.bf16.msra.mxu0 %v2152
    %2379 = vmatprep.subr.bf16.mxu0 %v2157
    %2380 = vmatpush1.bf16.msra.mxu0 %v2156
    %2381 = vmatprep.subr.bf16.mxu0 %v2161
    %2382 = vmatpush1.bf16.msra.mxu0 %v2160
    %2383 = vmatprep.subr.bf16.mxu0 %v2165
    %2384 = vmatpush1.bf16.msra.mxu0 %v2164
    %2385 = vmatprep.subr.bf16.mxu0 %v2169
    %2386 = vmatpush1.bf16.msra.mxu0 %v2168
    %2387 = vmatprep.subr.bf16.mxu0 %v2173
    %2388 = vmatpush1.bf16.msra.mxu0 %v2172
    %2389 = vmatprep.subr.bf16.mxu0 %v2177
    %2390 = vmatpush1.bf16.msra.mxu0 %v2176
    %2391 = vmatprep.subr.bf16.mxu0 %v2181
    %2392 = vmatpush1.bf16.msra.mxu0 %v2180
    %2393 = vmatprep.subr.bf16.mxu0 %v2185
    %2394 = vmatpush1.bf16.msra.mxu0 %v2184
    %2395 = vmatprep.subr.bf16.mxu0 %v2189
    %2396 = vmatpush1.bf16.msra.mxu0 %v2188
    %2397 = vmatprep.subr.bf16.mxu0 %v2193
    %2398 = vmatpush1.bf16.msra.mxu0 %v2192
    %2399 = vmatprep.subr.bf16.mxu0 %v2197
    %2400 = vmatpush1.bf16.msra.mxu0 %v2196
    %2401 = vmatprep.mubr.bf16.mxu0 %v1559
    %2402 = vmatmul.mubr.bf16.gmra.mrb[0].mxu0 %v1558
    %v2403 = vpop.f32.mrb[0].mxu0
    %v2404 = vadd.f32 %v2363, %v2403
    %v2405 = vpop.f32.mrb[0].mxu0
    %v2406 = vadd.f32 %v2365, %v2405
    %v2407 = vpop.f32.mrb[0].mxu0
    %v2408 = vpop.f32.mrb[0].mxu0
    %2409 = vdwg.mxu0
    %2410 = vmatprep.subr.bf16.mxu0 %v2075
    %2411 = vmatpush1.bf16.msra.mxu0 %v2074
    %2412 = vmatprep.subr.bf16.mxu0 %v2079
    %2413 = vmatpush1.bf16.msra.mxu0 %v2078
    %2414 = vmatprep.subr.bf16.mxu0 %v2083
    %2415 = vmatpush1.bf16.msra.mxu0 %v2082
    %2416 = vmatprep.subr.bf16.mxu0 %v2087
    %2417 = vmatpush1.bf16.msra.mxu0 %v2086
    %2418 = vmatprep.subr.bf16.mxu0 %v2091
    %2419 = vmatpush1.bf16.msra.mxu0 %v2090
    %2420 = vmatprep.subr.bf16.mxu0 %v2095
    %2421 = vmatpush1.bf16.msra.mxu0 %v2094
    %2422 = vmatprep.subr.bf16.mxu0 %v2099
    %2423 = vmatpush1.bf16.msra.mxu0 %v2098
    %2424 = vmatprep.subr.bf16.mxu0 %v2103
    %2425 = vmatpush1.bf16.msra.mxu0 %v2102
    %2426 = vmatprep.subr.bf16.mxu0 %v2107
    %2427 = vmatpush1.bf16.msra.mxu0 %v2106
    %2428 = vmatprep.subr.bf16.mxu0 %v2111
    %2429 = vmatpush1.bf16.msra.mxu0 %v2110
    %2430 = vmatprep.subr.bf16.mxu0 %v2115
    %2431 = vmatpush1.bf16.msra.mxu0 %v2114
    %2432 = vmatprep.subr.bf16.mxu0 %v2119
    %2433 = vmatpush1.bf16.msra.mxu0 %v2118
    %2434 = vmatprep.subr.bf16.mxu0 %v2123
    %2435 = vmatpush1.bf16.msra.mxu0 %v2122
    %2436 = vmatprep.subr.bf16.mxu0 %v2127
    %2437 = vmatpush1.bf16.msra.mxu0 %v2126
    %2438 = vmatprep.subr.bf16.mxu0 %v2131
    %2439 = vmatpush1.bf16.msra.mxu0 %v2130
    %2440 = vmatprep.subr.bf16.mxu0 %v2135
    %2441 = vmatpush1.bf16.msra.mxu0 %v2134
    %2442 = vmatprep.mubr.bf16.mxu0 %v1557
    %2443 = vmatmul.mubr.bf16.gmra.mrb[0].mxu0 %v1556
    %v2444 = vpop.f32.mrb[0].mxu0
    %v2445 = vadd.f32 0.0, %v2444
    %v2446 = vpop.f32.mrb[0].mxu0
    %v2447 = vadd.f32 0.0, %v2446
    %v2448 = vpop.f32.mrb[0].mxu0
    %v2449 = vpop.f32.mrb[0].mxu0
    %2450 = vdwg.mxu0
    %2451 = vmatprep.subr.bf16.mxu0 %v2139
    %2452 = vmatpush1.bf16.msra.mxu0 %v2138
    %2453 = vmatprep.subr.bf16.mxu0 %v2143
    %2454 = vmatpush1.bf16.msra.mxu0 %v2142
    %2455 = vmatprep.subr.bf16.mxu0 %v2147
    %2456 = vmatpush1.bf16.msra.mxu0 %v2146
    %2457 = vmatprep.subr.bf16.mxu0 %v2151
    %2458 = vmatpush1.bf16.msra.mxu0 %v2150
    %2459 = vmatprep.subr.bf16.mxu0 %v2155
    %2460 = vmatpush1.bf16.msra.mxu0 %v2154
    %2461 = vmatprep.subr.bf16.mxu0 %v2159
    %2462 = vmatpush1.bf16.msra.mxu0 %v2158
    %2463 = vmatprep.subr.bf16.mxu0 %v2163
    %2464 = vmatpush1.bf16.msra.mxu0 %v2162
    %2465 = vmatprep.subr.bf16.mxu0 %v2167
    %2466 = vmatpush1.bf16.msra.mxu0 %v2166
    %2467 = vmatprep.subr.bf16.mxu0 %v2171
    %2468 = vmatpush1.bf16.msra.mxu0 %v2170
    %2469 = vmatprep.subr.bf16.mxu0 %v2175
    %2470 = vmatpush1.bf16.msra.mxu0 %v2174
    %2471 = vmatprep.subr.bf16.mxu0 %v2179
    %2472 = vmatpush1.bf16.msra.mxu0 %v2178
    %2473 = vmatprep.subr.bf16.mxu0 %v2183
    %2474 = vmatpush1.bf16.msra.mxu0 %v2182
    %2475 = vmatprep.subr.bf16.mxu0 %v2187
    %2476 = vmatpush1.bf16.msra.mxu0 %v2186
    %2477 = vmatprep.subr.bf16.mxu0 %v2191
    %2478 = vmatpush1.bf16.msra.mxu0 %v2190
    %2479 = vmatprep.subr.bf16.mxu0 %v2195
    %2480 = vmatpush1.bf16.msra.mxu0 %v2194
    %2481 = vmatprep.subr.bf16.mxu0 %v2199
    %2482 = vmatpush1.bf16.msra.mxu0 %v2198
    %2483 = vmatprep.mubr.bf16.mxu0 %v1559
    %2484 = vmatmul.mubr.bf16.gmra.mrb[0].mxu0 %v1558
    %v2485 = vpop.f32.mrb[0].mxu0
    %v2486 = vadd.f32 %v2445, %v2485
    %v2487 = vpop.f32.mrb[0].mxu0
    %v2488 = vadd.f32 %v2447, %v2487
    %v2489 = vpop.f32.mrb[0].mxu0
    %v2490 = vpop.f32.mrb[0].mxu0
    %2491 = vdwg.mxu0
    %v2492 = vld [vmem:[%s9] sm:$0xf]
    %v2493 = vld [vmem:[%s10] sm:$0xf]
    %v2494 = vrot.slane %v2404, 4
    %v2495 = vadd.f32 %v2404, %v2494
    %v2496 = vrot.slane %v2495, 2
    %v2497 = vadd.f32 %v2495, %v2496
    %v2498 = vrot.slane %v2497, 1
    %v2499 = vadd.f32 %v2497, %v2498
    %v2500 = vrot.slane %v2406, 4
    %v2501 = vadd.f32 %v2406, %v2500
    %v2502 = vrot.slane %v2501, 2
    %v2503 = vadd.f32 %v2501, %v2502
    %v2504 = vrot.slane %v2503, 1
    %v2505 = vadd.f32 %v2503, %v2504
    %v2506 = vrot.slane %v2486, 4
    %v2507 = vadd.f32 %v2486, %v2506
    %v2508 = vrot.slane %v2507, 2
    %v2509 = vadd.f32 %v2507, %v2508
    %v2510 = vrot.slane %v2509, 1
    %v2511 = vadd.f32 %v2509, %v2510
    %v2512 = vrot.slane %v2488, 4
    %v2513 = vadd.f32 %v2488, %v2512
    %v2514 = vrot.slane %v2513, 2
    %v2515 = vadd.f32 %v2513, %v2514
    %v2516 = vrot.slane %v2515, 1
    %v2517 = vadd.f32 %v2515, %v2516
    %v2518 = vmul.f32 %v2404, %v2404
    %v2519 = vmul.f32 %v2406, %v2406
    %v2520 = vmul.f32 %v2486, %v2486
    %v2521 = vmul.f32 %v2488, %v2488
    %v2522 = vrot.slane %v2518, 4
    %v2523 = vadd.f32 %v2518, %v2522
    %v2524 = vrot.slane %v2523, 2
    %v2525 = vadd.f32 %v2523, %v2524
    %v2526 = vrot.slane %v2525, 1
    %v2527 = vadd.f32 %v2525, %v2526
    %v2528 = vrot.slane %v2519, 4
    %v2529 = vadd.f32 %v2519, %v2528
    %v2530 = vrot.slane %v2529, 2
    %v2531 = vadd.f32 %v2529, %v2530
    %v2532 = vrot.slane %v2531, 1
    %v2533 = vadd.f32 %v2531, %v2532
    %v2534 = vrot.slane %v2520, 4
    %v2535 = vadd.f32 %v2520, %v2534
    %v2536 = vrot.slane %v2535, 2
    %v2537 = vadd.f32 %v2535, %v2536
    %v2538 = vrot.slane %v2537, 1
    %v2539 = vadd.f32 %v2537, %v2538
    %v2540 = vrot.slane %v2521, 4
    %v2541 = vadd.f32 %v2521, %v2540
    %v2542 = vrot.slane %v2541, 2
    %v2543 = vadd.f32 %v2541, %v2542
    %v2544 = vrot.slane %v2543, 1
    %v2545 = vadd.f32 %v2543, %v2544
    %v2546 = vmul.f32 %v2499, 0.5
    %v2547 = vmul.f32 %v2505, 0.5
    %v2548 = vmul.f32 %v2511, 0.5
    %v2549 = vmul.f32 %v2517, 0.5
    %v2550 = vmul.f32 %v2527, 0.5
    %v2551 = vmul.f32 %v2533, 0.5
    %v2552 = vmul.f32 %v2539, 0.5
    %v2553 = vmul.f32 %v2545, 0.5
    %v2554 = vmul.f32 %v2546, %v2546
    %v2555 = vmul.f32 %v2547, %v2547
    %v2556 = vmul.f32 %v2548, %v2548
    %v2557 = vmul.f32 %v2549, %v2549
    %v2558 = vsub.f32 %v2550, %v2554
    %v2559 = vsub.f32 %v2551, %v2555
    %v2560 = vsub.f32 %v2552, %v2556
    %v2561 = vsub.f32 %v2553, %v2557
    %v2562 = vadd.f32 %v2558, 1e-05
    %v2563 = vadd.f32 %v2559, 1e-05
    %v2564 = vadd.f32 %v2560, 1e-05
    %v2565 = vadd.f32 %v2561, 1e-05
    %v2566 = vrsqrt.pop %v2562
    %v2567 = vrsqrt.pop %v2563
    %v2568 = vrsqrt.pop %v2564
    %v2569 = vrsqrt.pop %v2565
    %v2574 = vcombine.low %v2566, %v2567
    %v2575 = vcombine.low %v2568, %v2569
    %v2577 = vunpack.c.l.s4 1966171168
    %v2578 = vunpack.c.0.s8 %v2577
    %v2579 = vlaneseq
    %v2580 = vshrl.u32 %v2579, 7
    %v2581 = vsub.s32 %v2578, %v2580
    %v2582 = vrot.slane %v2574, %v2581
    %v2584 = vunpack.c.l.s4 1966171168
    %v2585 = vunpack.c.0.s8 %v2584
    %v2586 = vlaneseq
    %v2587 = vshrl.u32 %v2586, 7
    %v2588 = vsub.s32 %v2585, %v2587
    %v2589 = vrot.slane %v2575, %v2588
    %v2590 = vcombine.low %v2582, %v2589
    %v2592 = vunpack.c.l.s4 1966171168
    %v2593 = vunpack.c.0.s8 %v2592
    %v2594 = vlaneseq
    %v2595 = vshrl.u32 %v2594, 7
    %v2596 = vsub.s32 %v2593, %v2595
    %v2597 = vrot.slane %v2590, %v2596
    %v2599 = vmul.f32 %v2492, %v2597
    %v2601 = vlaneseq
    %v2602 = vshrl.u32 %v2601, 7
    %v2603 = vsub.s32 0, %v2602
    %v2604 = vrot.slane %v2599, %v2603
    %v2605 = vlaneseq
    %v2606 = vshrl.u32 %v2605, 7
    %v2607 = vsub.s32 1, %v2606
    %v2608 = vrot.slane %v2599, %v2607
    %v2609 = vlaneseq
    %v2610 = vshrl.u32 %v2609, 7
    %v2611 = vsub.s32 2, %v2610
    %v2612 = vrot.slane %v2599, %v2611
    %v2613 = vlaneseq
    %v2614 = vshrl.u32 %v2613, 7
    %v2615 = vsub.s32 3, %v2614
    %v2616 = vrot.slane %v2599, %v2615
    %v2621 = vmul.f32 %v2546, %v2604
    %v2622 = vmul.f32 %v2547, %v2608
    %v2623 = vmul.f32 %v2548, %v2612
    %v2624 = vmul.f32 %v2549, %v2616
    %v2629 = vcombine.low %v2621, %v2622
    %v2630 = vcombine.low %v2623, %v2624
    %v2632 = vunpack.c.l.s4 1966171168
    %v2633 = vunpack.c.0.s8 %v2632
    %v2634 = vlaneseq
    %v2635 = vshrl.u32 %v2634, 7
    %v2636 = vsub.s32 %v2633, %v2635
    %v2637 = vrot.slane %v2629, %v2636
    %v2639 = vunpack.c.l.s4 1966171168
    %v2640 = vunpack.c.0.s8 %v2639
    %v2641 = vlaneseq
    %v2642 = vshrl.u32 %v2641, 7
    %v2643 = vsub.s32 %v2640, %v2642
    %v2644 = vrot.slane %v2630, %v2643
    %v2645 = vcombine.low %v2637, %v2644
    %v2647 = vunpack.c.l.s4 1966171168
    %v2648 = vunpack.c.0.s8 %v2647
    %v2649 = vlaneseq
    %v2650 = vshrl.u32 %v2649, 7
    %v2651 = vsub.s32 %v2648, %v2650
    %v2652 = vrot.slane %v2645, %v2651
    %v2654 = vsub.f32 %v2493, %v2652
    %v2655 = vmul.f32 %v2404, %v2604
    %v2656 = vmul.f32 %v2406, %v2608
    %v2657 = vmul.f32 %v2486, %v2612
    %v2658 = vmul.f32 %v2488, %v2616
    %v2660 = vlaneseq
    %v2661 = vshrl.u32 %v2660, 7
    %v2662 = vsub.s32 0, %v2661
    %v2663 = vrot.slane %v2654, %v2662
    %v2664 = vlaneseq
    %v2665 = vshrl.u32 %v2664, 7
    %v2666 = vsub.s32 1, %v2665
    %v2667 = vrot.slane %v2654, %v2666
    %v2668 = vlaneseq
    %v2669 = vshrl.u32 %v2668, 7
    %v2670 = vsub.s32 2, %v2669
    %v2671 = vrot.slane %v2654, %v2670
    %v2672 = vlaneseq
    %v2673 = vshrl.u32 %v2672, 7
    %v2674 = vsub.s32 3, %v2673
    %v2675 = vrot.slane %v2654, %v2674
    %v2680 = vadd.f32 %v2655, %v2663
    %v2681 = vadd.f32 %v2656, %v2667
    %v2682 = vadd.f32 %v2657, %v2671
    %v2683 = vadd.f32 %v2658, %v2675
    %v2684 = vmul.f32 %v2680, 0.01
    %v2685 = vmul.f32 %v2681, 0.01
    %v2686 = vmul.f32 %v2682, 0.01
    %v2687 = vmul.f32 %v2683, 0.01
    %v2688 = vmax.f32 %v2680, %v2684
    %v2689 = vmax.f32 %v2681, %v2685
    %v2690 = vmax.f32 %v2682, %v2686
    %v2691 = vmax.f32 %v2683, %v2687
    %v2692 = vmul.f32 %v2688, %v410
    %v2693 = vmul.f32 %v2689, %v410
    %v2694 = vmul.f32 %v2690, %v410
    %v2695 = vmul.f32 %v2691, %v410
    %v2696 = vpack.c.bf16 %v2692, %v2692
    %v2697 = vpack.c.bf16 %v2693, %v2693
    %v2698 = vpack.c.bf16 %v2694, %v2694
    %v2699 = vpack.c.bf16 %v2695, %v2695
    %v2700 = vld [vmem:[#allocation7] sm:$0xf]
    %v2701 = vld [vmem:[#allocation7 + $0x4] sm:$0xf]
    %v2702 = vld [vmem:[#allocation7 + $0x8] sm:$0xf]
    %v2703 = vld [vmem:[#allocation7 + $0xc] sm:$0xf]
    %v2704 = vld [vmem:[#allocation7 + $0x10] sm:$0xf]
    %v2705 = vld [vmem:[#allocation7 + $0x14] sm:$0xf]
    %v2706 = vld [vmem:[#allocation7 + $0x18] sm:$0xf]
    %v2707 = vld [vmem:[#allocation7 + $0x1c] sm:$0xf]
    %v2708 = vld [vmem:[#allocation7 + $0x20] sm:$0xf]
    %v2709 = vld [vmem:[#allocation7 + $0x24] sm:$0xf]
    %v2710 = vld [vmem:[#allocation7 + $0x28] sm:$0xf]
    %v2711 = vld [vmem:[#allocation7 + $0x2c] sm:$0xf]
    %v2712 = vld [vmem:[#allocation7 + $0x30] sm:$0xf]
    %v2713 = vld [vmem:[#allocation7 + $0x34] sm:$0xf]
    %v2714 = vld [vmem:[#allocation7 + $0x38] sm:$0xf]
    %v2715 = vld [vmem:[#allocation7 + $0x3c] sm:$0xf]
    %v2716 = vld [vmem:[#allocation7 + $0x40] sm:$0xf]
    %v2717 = vld [vmem:[#allocation7 + $0x44] sm:$0xf]
    %v2718 = vld [vmem:[#allocation7 + $0x48] sm:$0xf]
    %v2719 = vld [vmem:[#allocation7 + $0x4c] sm:$0xf]
    %v2720 = vld [vmem:[#allocation7 + $0x50] sm:$0xf]
    %v2721 = vld [vmem:[#allocation7 + $0x54] sm:$0xf]
    %v2722 = vld [vmem:[#allocation7 + $0x58] sm:$0xf]
    %v2723 = vld [vmem:[#allocation7 + $0x5c] sm:$0xf]
    %v2724 = vld [vmem:[#allocation7 + $0x60] sm:$0xf]
    %v2725 = vld [vmem:[#allocation7 + $0x64] sm:$0xf]
    %v2726 = vld [vmem:[#allocation7 + $0x68] sm:$0xf]
    %v2727 = vld [vmem:[#allocation7 + $0x6c] sm:$0xf]
    %v2728 = vld [vmem:[#allocation7 + $0x70] sm:$0xf]
    %v2729 = vld [vmem:[#allocation7 + $0x74] sm:$0xf]
    %v2730 = vld [vmem:[#allocation7 + $0x78] sm:$0xf]
    %v2731 = vld [vmem:[#allocation7 + $0x7c] sm:$0xf]
    %v2732 = vld [vmem:[#allocation7 + $0x80] sm:$0xf]
    %v2733 = vld [vmem:[#allocation7 + $0x84] sm:$0xf]
    %v2734 = vld [vmem:[#allocation7 + $0x88] sm:$0xf]
    %v2735 = vld [vmem:[#allocation7 + $0x8c] sm:$0xf]
    %v2736 = vld [vmem:[#allocation7 + $0x90] sm:$0xf]
    %v2737 = vld [vmem:[#allocation7 + $0x94] sm:$0xf]
    %v2738 = vld [vmem:[#allocation7 + $0x98] sm:$0xf]
    %v2739 = vld [vmem:[#allocation7 + $0x9c] sm:$0xf]
    %v2740 = vld [vmem:[#allocation7 + $0xa0] sm:$0xf]
    %v2741 = vld [vmem:[#allocation7 + $0xa4] sm:$0xf]
    %v2742 = vld [vmem:[#allocation7 + $0xa8] sm:$0xf]
    %v2743 = vld [vmem:[#allocation7 + $0xac] sm:$0xf]
    %v2744 = vld [vmem:[#allocation7 + $0xb0] sm:$0xf]
    %v2745 = vld [vmem:[#allocation7 + $0xb4] sm:$0xf]
    %v2746 = vld [vmem:[#allocation7 + $0xb8] sm:$0xf]
    %v2747 = vld [vmem:[#allocation7 + $0xbc] sm:$0xf]
    %v2748 = vld [vmem:[#allocation7 + $0xc0] sm:$0xf]
    %v2749 = vld [vmem:[#allocation7 + $0xc4] sm:$0xf]
    %v2750 = vld [vmem:[#allocation7 + $0xc8] sm:$0xf]
    %v2751 = vld [vmem:[#allocation7 + $0xcc] sm:$0xf]
    %v2752 = vld [vmem:[#allocation7 + $0xd0] sm:$0xf]
    %v2753 = vld [vmem:[#allocation7 + $0xd4] sm:$0xf]
    %v2754 = vld [vmem:[#allocation7 + $0xd8] sm:$0xf]
    %v2755 = vld [vmem:[#allocation7 + $0xdc] sm:$0xf]
    %v2756 = vld [vmem:[#allocation7 + $0xe0] sm:$0xf]
    %v2757 = vld [vmem:[#allocation7 + $0xe4] sm:$0xf]
    %v2758 = vld [vmem:[#allocation7 + $0xe8] sm:$0xf]
    %v2759 = vld [vmem:[#allocation7 + $0xec] sm:$0xf]
    %v2760 = vld [vmem:[#allocation7 + $0xf0] sm:$0xf]
    %v2761 = vld [vmem:[#allocation7 + $0xf4] sm:$0xf]
    %v2762 = vld [vmem:[#allocation7 + $0xf8] sm:$0xf]
    %v2763 = vld [vmem:[#allocation7 + $0xfc] sm:$0xf]
    %v2764 = vld [vmem:[%s12] sm:$0x1]
    %v2766 = vlaneseq
    %v2767 = vshrl.u32 %v2766, 7
    %v2768 = vsub.s32 0, %v2767
    %v2769 = vrot.slane %v2764, %v2768
    %v2835 = vunpack.c.l.b16 %v2700
    %v2836 = vunpack.c.l.b16 %v2701
    %v2837 = vunpack.c.l.b16 %v2702
    %v2838 = vunpack.c.l.b16 %v2703
    %v2839 = vunpack.c.l.b16 %v2704
    %v2840 = vunpack.c.l.b16 %v2705
    %v2841 = vunpack.c.l.b16 %v2706
    %v2842 = vunpack.c.l.b16 %v2707
    %v2843 = vunpack.c.l.b16 %v2708
    %v2844 = vunpack.c.l.b16 %v2709
    %v2845 = vunpack.c.l.b16 %v2710
    %v2846 = vunpack.c.l.b16 %v2711
    %v2847 = vunpack.c.l.b16 %v2712
    %v2848 = vunpack.c.l.b16 %v2713
    %v2849 = vunpack.c.l.b16 %v2714
    %v2850 = vunpack.c.l.b16 %v2715
    %v2851 = vunpack.c.l.b16 %v2716
    %v2852 = vunpack.c.l.b16 %v2717
    %v2853 = vunpack.c.l.b16 %v2718
    %v2854 = vunpack.c.l.b16 %v2719
    %v2855 = vunpack.c.l.b16 %v2720
    %v2856 = vunpack.c.l.b16 %v2721
    %v2857 = vunpack.c.l.b16 %v2722
    %v2858 = vunpack.c.l.b16 %v2723
    %v2859 = vunpack.c.l.b16 %v2724
    %v2860 = vunpack.c.l.b16 %v2725
    %v2861 = vunpack.c.l.b16 %v2726
    %v2862 = vunpack.c.l.b16 %v2727
    %v2863 = vunpack.c.l.b16 %v2728
    %v2864 = vunpack.c.l.b16 %v2729
    %v2865 = vunpack.c.l.b16 %v2730
    %v2866 = vunpack.c.l.b16 %v2731
    %v2867 = vunpack.c.l.b16 %v2732
    %v2868 = vunpack.c.l.b16 %v2733
    %v2869 = vunpack.c.l.b16 %v2734
    %v2870 = vunpack.c.l.b16 %v2735
    %v2871 = vunpack.c.l.b16 %v2736
    %v2872 = vunpack.c.l.b16 %v2737
    %v2873 = vunpack.c.l.b16 %v2738
    %v2874 = vunpack.c.l.b16 %v2739
    %v2875 = vunpack.c.l.b16 %v2740
    %v2876 = vunpack.c.l.b16 %v2741
    %v2877 = vunpack.c.l.b16 %v2742
    %v2878 = vunpack.c.l.b16 %v2743
    %v2879 = vunpack.c.l.b16 %v2744
    %v2880 = vunpack.c.l.b16 %v2745
    %v2881 = vunpack.c.l.b16 %v2746
    %v2882 = vunpack.c.l.b16 %v2747
    %v2883 = vunpack.c.l.b16 %v2748
    %v2884 = vunpack.c.l.b16 %v2749
    %v2885 = vunpack.c.l.b16 %v2750
    %v2886 = vunpack.c.l.b16 %v2751
    %v2887 = vunpack.c.l.b16 %v2752
    %v2888 = vunpack.c.l.b16 %v2753
    %v2889 = vunpack.c.l.b16 %v2754
    %v2890 = vunpack.c.l.b16 %v2755
    %v2891 = vunpack.c.l.b16 %v2756
    %v2892 = vunpack.c.l.b16 %v2757
    %v2893 = vunpack.c.l.b16 %v2758
    %v2894 = vunpack.c.l.b16 %v2759
    %v2895 = vunpack.c.l.b16 %v2760
    %v2896 = vunpack.c.l.b16 %v2761
    %v2897 = vunpack.c.l.b16 %v2762
    %v2898 = vunpack.c.l.b16 %v2763
    %v2899 = vpack.c.b16 %v2836, %v2835
    %v2900 = vpack.c.b16 %v2838, %v2837
    %v2901 = vpack.c.b16 %v2840, %v2839
    %v2902 = vpack.c.b16 %v2842, %v2841
    %v2903 = vpack.c.b16 %v2844, %v2843
    %v2904 = vpack.c.b16 %v2846, %v2845
    %v2905 = vpack.c.b16 %v2848, %v2847
    %v2906 = vpack.c.b16 %v2850, %v2849
    %v2907 = vpack.c.b16 %v2852, %v2851
    %v2908 = vpack.c.b16 %v2854, %v2853
    %v2909 = vpack.c.b16 %v2856, %v2855
    %v2910 = vpack.c.b16 %v2858, %v2857
    %v2911 = vpack.c.b16 %v2860, %v2859
    %v2912 = vpack.c.b16 %v2862, %v2861
    %v2913 = vpack.c.b16 %v2864, %v2863
    %v2914 = vpack.c.b16 %v2866, %v2865
    %v2915 = vpack.c.b16 %v2868, %v2867
    %v2916 = vpack.c.b16 %v2870, %v2869
    %v2917 = vpack.c.b16 %v2872, %v2871
    %v2918 = vpack.c.b16 %v2874, %v2873
    %v2919 = vpack.c.b16 %v2876, %v2875
    %v2920 = vpack.c.b16 %v2878, %v2877
    %v2921 = vpack.c.b16 %v2880, %v2879
    %v2922 = vpack.c.b16 %v2882, %v2881
    %v2923 = vpack.c.b16 %v2884, %v2883
    %v2924 = vpack.c.b16 %v2886, %v2885
    %v2925 = vpack.c.b16 %v2888, %v2887
    %v2926 = vpack.c.b16 %v2890, %v2889
    %v2927 = vpack.c.b16 %v2892, %v2891
    %v2928 = vpack.c.b16 %v2894, %v2893
    %v2929 = vpack.c.b16 %v2896, %v2895
    %v2930 = vpack.c.b16 %v2898, %v2897
    %2963 = vmatprep.subr.bf16.mxu0 0
    %2964 = vmatpush1.bf16.msra.mxu0 %v2899
    %2965 = vmatprep.subr.bf16.mxu0 0
    %2966 = vmatpush1.bf16.msra.mxu0 %v2900
    %2967 = vmatprep.subr.bf16.mxu0 0
    %2968 = vmatpush1.bf16.msra.mxu0 %v2901
    %2969 = vmatprep.subr.bf16.mxu0 0
    %2970 = vmatpush1.bf16.msra.mxu0 %v2902
    %2971 = vmatprep.subr.bf16.mxu0 0
    %2972 = vmatpush1.bf16.msra.mxu0 %v2903
    %2973 = vmatprep.subr.bf16.mxu0 0
    %2974 = vmatpush1.bf16.msra.mxu0 %v2904
    %2975 = vmatprep.subr.bf16.mxu0 0
    %2976 = vmatpush1.bf16.msra.mxu0 %v2905
    %2977 = vmatprep.subr.bf16.mxu0 0
    %2978 = vmatpush1.bf16.msra.mxu0 %v2906
    %2979 = vmatprep.subr.bf16.mxu0 0
    %2980 = vmatpush1.bf16.msra.mxu0 %v2907
    %2981 = vmatprep.subr.bf16.mxu0 0
    %2982 = vmatpush1.bf16.msra.mxu0 %v2908
    %2983 = vmatprep.subr.bf16.mxu0 0
    %2984 = vmatpush1.bf16.msra.mxu0 %v2909
    %2985 = vmatprep.subr.bf16.mxu0 0
    %2986 = vmatpush1.bf16.msra.mxu0 %v2910
    %2987 = vmatprep.subr.bf16.mxu0 0
    %2988 = vmatpush1.bf16.msra.mxu0 %v2911
    %2989 = vmatprep.subr.bf16.mxu0 0
    %2990 = vmatpush1.bf16.msra.mxu0 %v2912
    %2991 = vmatprep.subr.bf16.mxu0 0
    %2992 = vmatpush1.bf16.msra.mxu0 %v2913
    %2993 = vmatprep.subr.bf16.mxu0 0
    %2994 = vmatpush1.bf16.msra.mxu0 %v2914
    %2995 = vmatprep.mubr.bf16.mxu0 %v2697
    %2996 = vmatmul.mubr.bf16.gmra.mrb[0].mxu0 %v2696
    %v2997 = vpop.f32.mrb[0].mxu0
    %v2998 = vadd.f32 %v2769, %v2997
    %v2999 = vpop.f32.mrb[0].mxu0
    %v3000 = vpop.f32.mrb[0].mxu0
    %v3001 = vpop.f32.mrb[0].mxu0
    %3002 = vdwg.mxu0
    %3003 = vmatprep.subr.bf16.mxu0 0
    %3004 = vmatpush1.bf16.msra.mxu0 %v2915
    %3005 = vmatprep.subr.bf16.mxu0 0
    %3006 = vmatpush1.bf16.msra.mxu0 %v2916
    %3007 = vmatprep.subr.bf16.mxu0 0
    %3008 = vmatpush1.bf16.msra.mxu0 %v2917
    %3009 = vmatprep.subr.bf16.mxu0 0
    %3010 = vmatpush1.bf16.msra.mxu0 %v2918
    %3011 = vmatprep.subr.bf16.mxu0 0
    %3012 = vmatpush1.bf16.msra.mxu0 %v2919
    %3013 = vmatprep.subr.bf16.mxu0 0
    %3014 = vmatpush1.bf16.msra.mxu0 %v2920
    %3015 = vmatprep.subr.bf16.mxu0 0
    %3016 = vmatpush1.bf16.msra.mxu0 %v2921
    %3017 = vmatprep.subr.bf16.mxu0 0
    %3018 = vmatpush1.bf16.msra.mxu0 %v2922
    %3019 = vmatprep.subr.bf16.mxu0 0
    %3020 = vmatpush1.bf16.msra.mxu0 %v2923
    %3021 = vmatprep.subr.bf16.mxu0 0
    %3022 = vmatpush1.bf16.msra.mxu0 %v2924
    %3023 = vmatprep.subr.bf16.mxu0 0
    %3024 = vmatpush1.bf16.msra.mxu0 %v2925
    %3025 = vmatprep.subr.bf16.mxu0 0
    %3026 = vmatpush1.bf16.msra.mxu0 %v2926
    %3027 = vmatprep.subr.bf16.mxu0 0
    %3028 = vmatpush1.bf16.msra.mxu0 %v2927
    %3029 = vmatprep.subr.bf16.mxu0 0
    %3030 = vmatpush1.bf16.msra.mxu0 %v2928
    %3031 = vmatprep.subr.bf16.mxu0 0
    %3032 = vmatpush1.bf16.msra.mxu0 %v2929
    %3033 = vmatprep.subr.bf16.mxu0 0
    %3034 = vmatpush1.bf16.msra.mxu0 %v2930
    %3035 = vmatprep.mubr.bf16.mxu0 %v2699
    %3036 = vmatmul.mubr.bf16.gmra.mrb[0].mxu0 %v2698
    %v3037 = vpop.f32.mrb[0].mxu0
    %v3038 = vadd.f32 %v2998, %v3037
    %v3039 = vpop.f32.mrb[0].mxu0
    %v3040 = vpop.f32.mrb[0].mxu0
    %v3041 = vpop.f32.mrb[0].mxu0
    %3042 = vdwg.mxu0
    %3043 = vst [vmem:[#allocation8] sm:$0xff] %v3038
    // Predicated region
    $region66: #{tpu_custom_call.1} parent=1 // pred_check
      _
    $region67: #{tpu_custom_call.1} parent=1 // pred_check_branch
      %3045 = sbr.rel (0) target = $region69
    $region68: #{tpu_custom_call.1} parent=1 // pred_region
      %s3047 = ssub.s32 128, 128
      %3048 = vsyncadd [#allocation4], %s3047
      %s3050 = sshll.u32 [#allocation8], 4
      %s3051 = int_to_ptr.vmem [resolvable:$true] %s3050
      %3053 = dma.vmem_to_hbm [thread:$0]  %s3051, 128, %s13, [#allocation4]
    $region69: #{tpu_custom_call.1} parent=1 // pred_fallthru
      _
    // Predicated region
    $region70: #{tpu_custom_call.1} parent=1 // pred_check
      _
    $region71: #{tpu_custom_call.1} parent=1 // pred_check_branch
      %3055 = sbr.rel (0) target = $region73
    $region72: #{tpu_custom_call.1} parent=1 // pred_region
      %3056 = dma.done [#allocation4], 128
    $region73: #{tpu_custom_call.1} parent=1 // pred_fallthru
      _
    %3057 = vsyncpa [#allocation3], 1
    %3058 = vsyncpa [#allocation6], 1
    %3059 = vsyncpa [#allocation4], 1

</llo_original>
